<compile_context>
chip_gen: v6e
topology: v6e:2x2x1
jax: 0.10.0
libtpu: 0.0.40
codegen_flags: <defaults>
</compile_context>

<pallas_src>
import functools
import math

import jax
import jax.numpy as jnp
from jax.experimental import pallas as pl
from jax.experimental.pallas import tpu as pltpu

_NEG = -1e30  # fc-bias padding value for the padded class lanes


def _round_up(x, m):
    return ((x + m - 1) // m) * m


def _pad2(a, shape):
    return jnp.pad(a, [(0, s - d) for d, s in zip(a.shape, shape)])


def _vmem_budget_bytes():
    """Per-generation VMEM budget: ~3/4 of capacity, capped at 100 MiB.

    v5e/v6e (128 MiB VMEM) -> 96 MiB; v7x (64 MiB per TC) -> 48 MiB.
    Conservative 48 MiB fallback if detection fails (safe on every chip).
    """
    cap = 64 * 1024 * 1024
    try:
        info_fn = getattr(pltpu, "get_tpu_info", None)
        if info_fn is not None:
            cap = int(getattr(info_fn(), "vmem_capacity_bytes", cap))
    except Exception:
        cap = 64 * 1024 * 1024
    return min(100 * 1024 * 1024, (cap * 3) // 4)


_VMEM_BUDGET = _vmem_budget_bytes()


def _select_tiles(n, tm_req, tk_req):
    """Pick (tm, tk, n_pad) with tm | n_pad, tk | n_pad, both multiples of 128.

    Row padding waste stays < tm; tk is chosen as the largest multiple-of-128
    divisor of n_pad that is <= tk_req (so no lcm-driven padding inflation).
    """
    n128 = _round_up(n, 128)
    tm = max(128, min(tm_req, n128))
    n_pad = _round_up(n128, tm)
    units = n_pad // 128
    tk = 128
    for d in range(1, units + 1):
        if units % d == 0 and d * 128 <= tk_req:
            tk = d * 128
    return tm, tk, n_pad


def _slab_resident_fits(n_pad, slab_w, tm, tk, out_w, budget):
    """Can the full (n_pad, slab_w) bf16 contraction slab stay VMEM-resident?"""
    need = (2 * (2 * n_pad * slab_w)        # resident bf16 slab (x2 pipeline bufs)
            + 2 * (2 * tm * tk)             # Â tile, double buffered, bf16
            + 4 * tm * slab_w               # f32 accumulator scratch
            + 2 * (4 * slab_w * out_w)      # f32 weights (x2 buffers)
            + 2 * (4 * out_w * out_w)       # second weight matrix (generous)
            + 2 * (4 * tm * out_w)          # output tile
            + (2 << 20))                    # headroom for compiler temporaries
    return need <= (budget * 4) // 5


def normalized_adjacency_padded(edge_index, edge_weight, num_nodes, n_pad,
                                dtype=jnp.bfloat16):
    """Dense Â = D^{-1/2}(A + I)D^{-1/2} (PyG gcn_norm), built directly at the
    padded (n_pad, n_pad) shape and cast to `dtype` in one fused pass.
    Padded rows/cols have zero degree -> zero rows/cols (inert)."""
    src = edge_index[0]
    dst = edge_index[1]
    if edge_weight is None:
        edge_weight = jnp.ones(src.shape[0], dtype=jnp.float32)
    a = jnp.zeros((n_pad, n_pad), jnp.float32)
    a = a.at[dst, src].add(edge_weight.astype(jnp.float32))
    diag = jnp.arange(num_nodes)
    a = a.at[diag, diag].add(1.0)                    # self loops (real nodes only)
    deg = a.sum(axis=1)
    dinv = jnp.where(deg > 0.0, 1.0 / jnp.sqrt(deg), 0.0)
    return (dinv[:, None] * a * dinv[None, :]).astype(dtype)


# ---------------------------------------------------------------------------
# Fused single-kernel path (small graphs): Â resident in VMEM, both
# propagations + fc + log_softmax in one pallas_call.
# ---------------------------------------------------------------------------
def _gcn_fused_kernel(adj_ref, x_ref, w1_ref, b1_ref, w2_ref, b2_ref,
                      wfc_ref, bfc_ref, out_ref):
    adj = adj_ref[...]                                              # bf16
    ax = jnp.dot(adj, x_ref[...], preferred_element_type=jnp.float32)
    h1 = jnp.maximum(
        jnp.dot(ax, w1_ref[...], preferred_element_type=jnp.float32) + b1_ref[...],
        0.0)
    ah = jnp.dot(adj, h1.astype(jnp.bfloat16),
                 preferred_element_type=jnp.float32)
    h2 = jnp.maximum(
        jnp.dot(ah, w2_ref[...], preferred_element_type=jnp.float32) + b2_ref[...],
        0.0)
    logits = jnp.dot(h2, wfc_ref[...],
                     preferred_element_type=jnp.float32) + bfc_ref[...]
    # Stable log_softmax in f32; padded class lanes carry a -1e30 bias.
    m = jnp.max(logits, axis=1, keepdims=True)
    lse = m + jnp.log(jnp.sum(jnp.exp(logits - m), axis=1, keepdims=True))
    out_ref[...] = logits - lse


def _gcn_fused(adj, x, w1, b1, w2, b2, wfc, bfc, *, budget):
    n_pad = adj.shape[0]
    f_pad = x.shape[1]
    h_pad = w1.shape[1]
    c_pad = wfc.shape[1]
    cost = pl.CostEstimate(
        flops=(2 * n_pad * n_pad * (f_pad + h_pad)
               + 2 * n_pad * (f_pad * h_pad + h_pad * h_pad + h_pad * c_pad)),
        transcendentals=n_pad * (c_pad + 1),
        bytes_accessed=(2 * n_pad * n_pad + 2 * n_pad * f_pad
                        + 4 * (f_pad * h_pad + h_pad * h_pad + h_pad * c_pad)
                        + 4 * n_pad * c_pad))
    return pl.pallas_call(
        _gcn_fused_kernel,
        out_shape=jax.ShapeDtypeStruct((n_pad, c_pad), jnp.float32),
        compiler_params=pltpu.CompilerParams(vmem_limit_bytes=budget),
        cost_estimate=cost,
    )(adj, x, w1, b1, w2, b2, wfc, bfc)


# ---------------------------------------------------------------------------
# Tiled path, kernel 1: one GCN layer   h = relu((Â @ X) @ W + b)
#   grid = (n_pad//tm row tiles  [parallel],  n_pad//tk K tiles  [arbitrary])
# ---------------------------------------------------------------------------
def _gcn_layer_kernel(adj_ref, x_ref, w_ref, b_ref, h_ref, acc_ref,
                      *, x_resident, tk):
    k = pl.program_id(1)

    @pl.when(k == 0)
    def _():
        acc_ref[...] = jnp.zeros_like(acc_ref)

    if x_resident:
        # X slab is fully VMEM-resident; slice the current K block in-kernel.
        x_blk = x_ref[pl.ds(pl.multiple_of(k * tk, tk), tk), :]
    else:
        x_blk = x_ref[...]
    # acc[i] += Â[i, k] @ X[k]   (bf16 operands, f32 accumulation on the MXU)
    acc_ref[...] += jnp.dot(adj_ref[...], x_blk,
                            preferred_element_type=jnp.float32)

    @pl.when(k == pl.num_programs(1) - 1)
    def _():
        # (Â @ X) @ W == Â @ (X @ W); weight matmul applied once per row tile,
        # kept in f32 (off the bandwidth-critical path).
        h = jnp.dot(acc_ref[...], w_ref[...],
                    preferred_element_type=jnp.float32) + b_ref[...]
        # F.dropout(training=False) and use_ln=False -> identity.
        h_ref[...] = jnp.maximum(h, 0.0).astype(h_ref.dtype)


def _gcn_layer(adj, x, w, b, *, tm, tk, budget, x_resident=None):
    n_pad = adj.shape[0]
    f_pad = x.shape[1]
    h_pad = w.shape[1]
    if x_resident is None:
        x_resident = _slab_resident_fits(n_pad, f_pad, tm, tk, h_pad, budget)
    grid = (n_pad // tm, n_pad // tk)
    restream = 1 if x_resident else (n_pad // tm)
    cost = pl.CostEstimate(
        flops=2 * n_pad * n_pad * f_pad + 2 * n_pad * f_pad * h_pad,
        transcendentals=0,
        bytes_accessed=(2 * n_pad * n_pad + 2 * n_pad * f_pad * restream
                        + 4 * f_pad * h_pad + 4 * h_pad + 2 * n_pad * h_pad))
    if x_resident:
        x_spec = pl.BlockSpec((n_pad, f_pad), lambda i, k: (0, 0))   # loaded once
    else:
        x_spec = pl.BlockSpec((tk, f_pad), lambda i, k: (k, 0))      # streamed
    kern = functools.partial(_gcn_layer_kernel, x_resident=x_resident, tk=tk)
    return pl.pallas_call(
        kern,
        out_shape=jax.ShapeDtypeStruct((n_pad, h_pad), jnp.bfloat16),
        grid_spec=pltpu.PrefetchScalarGridSpec(
            num_scalar_prefetch=0,
            grid=grid,
            in_specs=[
                pl.BlockSpec((tm, tk), lambda i, k: (i, k)),         # Â tile
                x_spec,                                              # X slab
                pl.BlockSpec((f_pad, h_pad), lambda i, k: (0, 0)),   # W (resident)
                pl.BlockSpec((1, h_pad), lambda i, k: (0, 0)),       # b (resident)
            ],
            out_specs=pl.BlockSpec((tm, h_pad), lambda i, k: (i, 0)),
            scratch_shapes=[pltpu.VMEM((tm, f_pad), jnp.float32)],
        ),
        compiler_params=pltpu.CompilerParams(
            dimension_semantics=("parallel", "arbitrary"),
            vmem_limit_bytes=budget,
        ),
        cost_estimate=cost,
    )(adj, x, w, b)


# ---------------------------------------------------------------------------
# Tiled path, kernel 2: GCN layer 2 + fc + log_softmax, fused
#   out[i] = log_softmax( relu((Â[i,:] @ H1) @ W2 + b2) @ Wfc + bfc )
# ---------------------------------------------------------------------------
def _gcn_final_kernel(adj_ref, h1_ref, w2_ref, b2_ref, wfc_ref, bfc_ref,
                      out_ref, acc_ref, *, x_resident, tk):
    k = pl.program_id(1)

    @pl.when(k == 0)
    def _():
        acc_ref[...] = jnp.zeros_like(acc_ref)

    if x_resident:
        h_blk = h1_ref[pl.ds(pl.multiple_of(k * tk, tk), tk), :]
    else:
        h_blk = h1_ref[...]
    acc_ref[...] += jnp.dot(adj_ref[...], h_blk,
                            preferred_element_type=jnp.float32)

    @pl.when(k == pl.num_programs(1) - 1)
    def _():
        h2 = jnp.dot(acc_ref[...], w2_ref[...],
                     preferred_element_type=jnp.float32) + b2_ref[...]
        h2 = jnp.maximum(h2, 0.0)
        logits = jnp.dot(h2, wfc_ref[...],
                         preferred_element_type=jnp.float32) + bfc_ref[...]
        # Stable log_softmax over the 128 padded class lanes (f32 only).
        m = jnp.max(logits, axis=1, keepdims=True)
        lse = m + jnp.log(jnp.sum(jnp.exp(logits - m), axis=1, keepdims=True))
        out_ref[...] = logits - lse


def _gcn_final(adj, h1, w2, b2, wfc, bfc, *, tm, tk, budget, x_resident=None):
    n_pad = adj.shape[0]
    h_pad = w2.shape[0]
    c_pad = wfc.shape[1]
    if x_resident is None:
        x_resident = _slab_resident_fits(n_pad, h_pad, tm, tk, c_pad, budget)
    grid = (n_pad // tm, n_pad // tk)
    restream = 1 if x_resident else (n_pad // tm)
    cost = pl.CostEstimate(
        flops=(2 * n_pad * n_pad * h_pad + 2 * n_pad * h_pad * h_pad
               + 2 * n_pad * h_pad * c_pad),
        transcendentals=n_pad * (c_pad + 1),
        bytes_accessed=(2 * n_pad * n_pad + 2 * n_pad * h_pad * restream
                        + 4 * h_pad * h_pad + 4 * h_pad + 4 * h_pad * c_pad
                        + 4 * c_pad + 4 * n_pad * c_pad))
    if x_resident:
        h1_spec = pl.BlockSpec((n_pad, h_pad), lambda i, k: (0, 0))
    else:
        h1_spec = pl.BlockSpec((tk, h_pad), lambda i, k: (k, 0))
    kern = functools.partial(_gcn_final_kernel, x_resident=x_resident, tk=tk)
    return pl.pallas_call(
        kern,
        out_shape=jax.ShapeDtypeStruct((n_pad, c_pad), jnp.float32),
        grid_spec=pltpu.PrefetchScalarGridSpec(
            num_scalar_prefetch=0,
            grid=grid,
            in_specs=[
                pl.BlockSpec((tm, tk), lambda i, k: (i, k)),         # Â tile
                h1_spec,                                             # H1 slab
                pl.BlockSpec((h_pad, h_pad), lambda i, k: (0, 0)),   # W2
                pl.BlockSpec((1, h_pad), lambda i, k: (0, 0)),       # b2
                pl.BlockSpec((h_pad, c_pad), lambda i, k: (0, 0)),   # Wfc
                pl.BlockSpec((1, c_pad), lambda i, k: (0, 0)),       # bfc
            ],
            out_specs=pl.BlockSpec((tm, c_pad), lambda i, k: (i, 0)),
            scratch_shapes=[pltpu.VMEM((tm, h_pad), jnp.float32)],
        ),
        compiler_params=pltpu.CompilerParams(
            dimension_semantics=("parallel", "arbitrary"),
            vmem_limit_bytes=budget,
        ),
        cost_estimate=cost,
    )(adj, h1, w2, b2, wfc, bfc)


# ---------------------------------------------------------------------------
# Full forward (wrapper): build padded bf16 Â, pick tiles/path, run kernels.
# ---------------------------------------------------------------------------
@functools.partial(jax.jit,
                   static_argnames=("tm", "tk", "x_resident", "allow_fused"))
def gcn_encoder_forward(x, edge_index, edge_weight,
                        w1, b1, w2, b2, wfc, bfc,
                        *, tm=None, tk=None, x_resident=None, allow_fused=True):
    n, nfeat = x.shape
    nhid = w1.shape[1]
    nclass = wfc.shape[1]
    budget = _VMEM_BUDGET

    # Defaults: ~2 MiB bf16 Â tiles on v5e/v6e (512x2048), ~4 MiB on v7x
    # (1024x2048) where HBM is ~2.3x faster and the row axis shards across 2 TCs.
    if tm is None:
        tm = 1024 if budget <= 48 * 1024 * 1024 else 512
    if tk is None:
        tk = 2048
    assert tm % 128 == 0 and tk % 128 == 0, "tm/tk must be multiples of 128"

    f_pad = _round_up(nfeat, 128)
    h_pad = _round_up(nhid, 128)
    c_pad = _round_up(nclass, 128)
    tm, tk, n_pad = _select_tiles(n, tm, tk)

    # NOTE: if the graph is static across calls, Â construction can be hoisted
    # out of the per-forward jit (it is pure XLA glue, O(N^2) HBM).
    adj_p = normalized_adjacency_padded(edge_index, edge_weight, n, n_pad,
                                        dtype=jnp.bfloat16)
    x_p = _pad2(x, (n_pad, f_pad)).astype(jnp.bfloat16)
    w1_p = _pad2(w1, (f_pad, h_pad)).astype(jnp.float32)
    b1_p = _pad2(b1.reshape(1, -1), (1, h_pad)).astype(jnp.float32)
    w2_p = _pad2(w2, (h_pad, h_pad)).astype(jnp.float32)
    b2_p = _pad2(b2.reshape(1, -1), (1, h_pad)).astype(jnp.float32)
    wfc_p = _pad2(wfc, (h_pad, c_pad)).astype(jnp.float32)
    bfc_p = jnp.full((1, c_pad), _NEG, jnp.float32).at[0, :nclass].set(
        bfc.astype(jnp.float32))

    # Fused single-kernel path for small graphs: Â streamed from HBM once,
    # no h1 HBM round trip, one kernel launch.
    fused_bytes = (2 * n_pad * n_pad                       # Â bf16
                   + 2 * n_pad * f_pad                     # X bf16
                   + 4 * n_pad * c_pad                     # out f32
                   + 4 * n_pad * (f_pad + 3 * h_pad)       # f32 temporaries
                   + 4 * (f_pad * h_pad + h_pad * h_pad + h_pad * c_pad))
    if allow_fused and fused_bytes <= (budget * 3) // 5:
        out_p = _gcn_fused(adj_p, x_p, w1_p, b1_p, w2_p, b2_p, wfc_p, bfc_p,
                           budget=budget)
    else:
        h1 = _gcn_layer(adj_p, x_p, w1_p, b1_p,
                        tm=tm, tk=tk, budget=budget, x_resident=x_resident)
        out_p = _gcn_final(adj_p, h1, w2_p, b2_p, wfc_p, bfc_p,
                           tm=tm, tk=tk, budget=budget, x_resident=x_resident)
    return out_p[:n, :nclass]


def reference_forward(x, edge_index, edge_weight, w1, b1, w2, b2, wfc, bfc):
    n = x.shape[0]
    adj = normalized_adjacency_padded(edge_index, edge_weight, n, n,
                                      dtype=jnp.float32)
    h = jnp.maximum(adj @ (x @ w1) + b1, 0.0)
    h = jnp.maximum(adj @ (h @ w2) + b2, 0.0)
    logits = h @ wfc + bfc
    return jax.nn.log_softmax(logits, axis=1)


def _make_inputs(key, n, nfeat, nhid, nclass, nedges):
    kx, ke, k1, k2, k3, k4, k5, k6 = jax.random.split(key, 8)
    x = jax.random.normal(kx, (n, nfeat), dtype=jnp.float32)
    edge_index = jax.random.randint(ke, (2, nedges), 0, n, dtype=jnp.int32)

    def init(k, shape):
        return jax.random.normal(k, shape, dtype=jnp.float32) / jnp.sqrt(float(shape[0]))

    params = (init(k1, (nfeat, nhid)),
              0.01 * jax.random.normal(k2, (nhid,), dtype=jnp.float32),
              init(k3, (nhid, nhid)),
              0.01 * jax.random.normal(k4, (nhid,), dtype=jnp.float32),
              init(k5, (nhid, nclass)),
              0.01 * jax.random.normal(k6, (nclass,), dtype=jnp.float32))
    return x, edge_index, params


def _check(out, ref, n, nclass):
    assert out.shape == (n, nclass)
    # bf16 Â/X/H1 MXU operands (f32 accumulation / f32 weight matmuls).
    assert jnp.allclose(out, ref, atol=5e-2, rtol=5e-2), "mismatch vs reference"
    # log_softmax rows must exp-sum to 1 (padded class lanes contribute 0).
    assert jnp.allclose(jnp.exp(out).sum(axis=1), 1.0, atol=1e-3)


if __name__ == "__main__":
    key = jax.random.PRNGKey(0)
    k_a, k_b = jax.random.split(key, 2)

    # --- Test 1: small graph -> fused single-kernel path (Â VMEM-resident). ---
    N1, F1, H1, C1, E1 = 200, 32, 32, 8, 800
    x1, ei1, (w1a, b1a, w2a, b2a, wfca, bfca) = _make_inputs(k_a, N1, F1, H1, C1, E1)
    out1 = gcn_encoder_forward(x1, ei1, None, w1a, b1a, w2a, b2a, wfca, bfca)
    out1 = jax.block_until_ready(out1)
    ref1 = reference_forward(x1, ei1, None, w1a, b1a, w2a, b2a, wfca, bfca)
    _check(out1, ref1, N1, C1)

    # --- Test 2: tiled two-kernel path, VMEM-resident K-slab (auto). ---------
    N2, F2, H2, C2, E2 = 700, 48, 32, 7, 2800
    x2, ei2, (w1b, b1b, w2b, b2b, wfcb, bfcb) = _make_inputs(k_b, N2, F2, H2, C2, E2)
    out2 = gcn_encoder_forward(x2, ei2, None, w1b, b1b, w2b, b2b, wfcb, bfcb,
                               tm=256, tk=256, allow_fused=False)
    out2 = jax.block_until_ready(out2)
    ref2 = reference_forward(x2, ei2, None, w1b, b1b, w2b, b2b, wfcb, bfcb)
    _check(out2, ref2, N2, C2)

    # --- Test 3: tiled path with streamed (non-resident) K-slabs. ------------
    out3 = gcn_encoder_forward(x2, ei2, None, w1b, b1b, w2b, b2b, wfcb, bfcb,
                               tm=256, tk=256, allow_fused=False,
                               x_resident=False)
    out3 = jax.block_until_ready(out3)
    _check(out3, ref2, N2, C2)

    print("KERNEL_OK")
</pallas_src>

<mosaic_0001>
module attributes {stable_mosaic.version = 11 : i64} {
  func.func private @main(%arg0: i32) attributes {dimension_semantics = [#tpu.dimension_semantics<core_parallel>], iteration_bounds = array<i64: 2>, tpu.core_type = #tpu.core_type<sc_scalar_subcore>, window_params = []} {
    return
  }
}

module attributes {stable_mosaic.version = 11 : i64} {
  func.func private @main(%arg0: i32) attributes {dimension_semantics = [#tpu.dimension_semantics<core_parallel>], iteration_bounds = array<i64: 2>, tpu.core_type = #tpu.core_type<sc_scalar_subcore>, window_params = []} {
    return
  }
}

module attributes {stable_mosaic.version = 11 : i64} {
  func.func @_gcn_fused_kernel(%arg0: memref<256x256xbf16, #tpu.memory_space<vmem>>, %arg1: memref<256x128xbf16, #tpu.memory_space<vmem>>, %arg2: memref<128x128xf32, #tpu.memory_space<vmem>>, %arg3: memref<1x128xf32, #tpu.memory_space<vmem>>, %arg4: memref<128x128xf32, #tpu.memory_space<vmem>>, %arg5: memref<1x128xf32, #tpu.memory_space<vmem>>, %arg6: memref<128x128xf32, #tpu.memory_space<vmem>>, %arg7: memref<1x128xf32, #tpu.memory_space<vmem>>, %arg8: memref<256x128xf32, #tpu.memory_space<vmem>>) attributes {dimension_semantics = [], scalar_prefetch = 0 : i64, scratch_operands = 0 : i64, tpu.core_type = #tpu.core_type<tc>} {
    %c0 = arith.constant 0 : index
    %c0_0 = arith.constant 0 : index
    %0 = vector.load %arg0[%c0, %c0_0] : memref<256x256xbf16, #tpu.memory_space<vmem>>, vector<256x256xbf16>
    %c0_1 = arith.constant 0 : index
    %c0_2 = arith.constant 0 : index
    %1 = vector.load %arg1[%c0_1, %c0_2] : memref<256x128xbf16, #tpu.memory_space<vmem>>, vector<256x128xbf16>
    %cst = arith.constant dense<0.000000e+00> : vector<256x128xf32>
    %2 = tpu.matmul %0, %1, %cst {dimension_numbers = #tpu.dot_dimension_numbers<[1], [0], [0], [1], [0, 0, 1, 1], [], []>} : vector<256x256xbf16>, vector<256x128xbf16>, vector<256x128xf32> -> vector<256x128xf32>
    %c0_3 = arith.constant 0 : index
    %c0_4 = arith.constant 0 : index
    %3 = vector.load %arg2[%c0_3, %c0_4] : memref<128x128xf32, #tpu.memory_space<vmem>>, vector<128x128xf32>
    %cst_5 = arith.constant dense<0.000000e+00> : vector<256x128xf32>
    %4 = tpu.matmul %2, %3, %cst_5 {dimension_numbers = #tpu.dot_dimension_numbers<[1], [0], [0], [1], [0, 0, 1, 1], [], []>} : vector<256x128xf32>, vector<128x128xf32>, vector<256x128xf32> -> vector<256x128xf32>
    %c0_6 = arith.constant 0 : index
    %c0_7 = arith.constant 0 : index
    %5 = vector.load %arg3[%c0_6, %c0_7] : memref<1x128xf32, #tpu.memory_space<vmem>>, vector<1x128xf32>
    %6 = vector.broadcast %5 : vector<1x128xf32> to vector<256x128xf32>
    %7 = arith.addf %4, %6 : vector<256x128xf32>
    %cst_8 = arith.constant 0.000000e+00 : f32
    %8 = vector.broadcast %cst_8 : f32 to vector<256x128xf32>
    %9 = arith.maximumf %7, %8 : vector<256x128xf32>
    %10 = arith.truncf %9 : vector<256x128xf32> to vector<256x128xbf16>
    %cst_9 = arith.constant dense<0.000000e+00> : vector<256x128xf32>
    %11 = tpu.matmul %0, %10, %cst_9 {dimension_numbers = #tpu.dot_dimension_numbers<[1], [0], [0], [1], [0, 0, 1, 1], [], []>} : vector<256x256xbf16>, vector<256x128xbf16>, vector<256x128xf32> -> vector<256x128xf32>
    %c0_10 = arith.constant 0 : index
    %c0_11 = arith.constant 0 : index
    %12 = vector.load %arg4[%c0_10, %c0_11] : memref<128x128xf32, #tpu.memory_space<vmem>>, vector<128x128xf32>
    %cst_12 = arith.constant dense<0.000000e+00> : vector<256x128xf32>
    %13 = tpu.matmul %11, %12, %cst_12 {dimension_numbers = #tpu.dot_dimension_numbers<[1], [0], [0], [1], [0, 0, 1, 1], [], []>} : vector<256x128xf32>, vector<128x128xf32>, vector<256x128xf32> -> vector<256x128xf32>
    %c0_13 = arith.constant 0 : index
    %c0_14 = arith.constant 0 : index
    %14 = vector.load %arg5[%c0_13, %c0_14] : memref<1x128xf32, #tpu.memory_space<vmem>>, vector<1x128xf32>
    %15 = vector.broadcast %14 : vector<1x128xf32> to vector<256x128xf32>
    %16 = arith.addf %13, %15 : vector<256x128xf32>
    %cst_15 = arith.constant 0.000000e+00 : f32
    %17 = vector.broadcast %cst_15 : f32 to vector<256x128xf32>
    %18 = arith.maximumf %16, %17 : vector<256x128xf32>
    %c0_16 = arith.constant 0 : index
    %c0_17 = arith.constant 0 : index
    %19 = vector.load %arg6[%c0_16, %c0_17] : memref<128x128xf32, #tpu.memory_space<vmem>>, vector<128x128xf32>
    %cst_18 = arith.constant dense<0.000000e+00> : vector<256x128xf32>
    %20 = tpu.matmul %18, %19, %cst_18 {dimension_numbers = #tpu.dot_dimension_numbers<[1], [0], [0], [1], [0, 0, 1, 1], [], []>} : vector<256x128xf32>, vector<128x128xf32>, vector<256x128xf32> -> vector<256x128xf32>
    %c0_19 = arith.constant 0 : index
    %c0_20 = arith.constant 0 : index
    %21 = vector.load %arg7[%c0_19, %c0_20] : memref<1x128xf32, #tpu.memory_space<vmem>>, vector<1x128xf32>
    %22 = vector.broadcast %21 : vector<1x128xf32> to vector<256x128xf32>
    %23 = arith.addf %20, %22 : vector<256x128xf32>
    %cst_21 = arith.constant dense<0xFF800000> : vector<256xf32>
    %24 = vector.multi_reduction <maximumf>, %23, %cst_21 [1] : vector<256x128xf32> to vector<256xf32>
    %25 = vector.shape_cast %24 : vector<256xf32> to vector<256x1xf32>
    %26 = vector.broadcast %25 : vector<256x1xf32> to vector<256x128xf32>
    %27 = arith.subf %23, %26 : vector<256x128xf32>
    %28 = math.exp %27 : vector<256x128xf32>
    %cst_22 = arith.constant dense<0.000000e+00> : vector<256xf32>
    %29 = vector.multi_reduction <add>, %28, %cst_22 [1] : vector<256x128xf32> to vector<256xf32>
    %30 = vector.shape_cast %29 : vector<256xf32> to vector<256x1xf32>
    %31 = math.log %30 : vector<256x1xf32>
    %32 = arith.addf %25, %31 : vector<256x1xf32>
    %33 = vector.broadcast %32 : vector<256x1xf32> to vector<256x128xf32>
    %34 = arith.subf %23, %33 : vector<256x128xf32>
    %c0_23 = arith.constant 0 : index
    %c0_24 = arith.constant 0 : index
    %35 = vector.load %arg8[%c0_23, %c0_24] : memref<256x128xf32, #tpu.memory_space<vmem>>, vector<256x128xf32>
    tpu.vector_store %arg8[%c0_23, %c0_24], %34 {strides = array<i32>} : memref<256x128xf32, #tpu.memory_space<vmem>>, vector<256x128xf32>,
    return
  }
}

</mosaic_0001>

<llo_original>
// kernel: gcn_encoder_forward.1
$region0: #{gcn_encoder_forward.1}
  #allocation0 [shape = 'u32[]', space=smem, size = 0x4, offset = 0x4, fixed_abs, tag = 'smem constant byte address 0x4 - core index']
  #allocation1 [shape = 'u32[144,128]{1,0:T(1,128)}', space=vmem, size = 0x12000, scoped, tag = 'internal scratch']
  %s0 = inlined_call_operand.vmem [shape: bf16[256,256], index: 0, kind: input, shape index: {}]
  %s1 = inlined_call_operand.vmem [shape: bf16[256,128], index: 1, kind: input, shape index: {}]
  %s2 = inlined_call_operand.vmem [shape: f32[128,128], index: 2, kind: input, shape index: {}]
  %s3 = inlined_call_operand.vmem [shape: f32[1,128], index: 3, kind: input, shape index: {}]
  %s4 = inlined_call_operand.vmem [shape: f32[128,128], index: 4, kind: input, shape index: {}]
  %s5 = inlined_call_operand.vmem [shape: f32[1,128], index: 5, kind: input, shape index: {}]
  %s6 = inlined_call_operand.vmem [shape: f32[128,128], index: 6, kind: input, shape index: {}]
  %s7 = inlined_call_operand.vmem [shape: f32[1,128], index: 7, kind: input, shape index: {}]
  %s8 = inlined_call_operand.vmem [shape: f32[256,128], index: 8, kind: output, shape index: {}]
  %s9 = sld [smem:[#allocation0]]
  $region42: #{gcn_encoder_forward.1} parent=0
    _
  %s11 = ssub.s32 1, %s9
  %s12 = scalar_select 0, %s11, %s9
  // Predicated region
  $region2: #{gcn_encoder_forward.1} parent=0 // pred_check
    _
  $region3: #{gcn_encoder_forward.1} parent=0 // pred_check_branch
    %14 = sbr.rel (0) target = $region5
  $region4: #{gcn_encoder_forward.1} parent=0 // pred_region
    _
  $region5: #{gcn_encoder_forward.1} parent=0 // pred_fallthru
    _
  // Predicated region
  $region6: #{gcn_encoder_forward.1} parent=0 // pred_check
    _
  $region7: #{gcn_encoder_forward.1} parent=0 // pred_check_branch
    %16 = sbr.rel (0) target = $region9
  $region8: #{gcn_encoder_forward.1} parent=0 // pred_region
    _
  $region9: #{gcn_encoder_forward.1} parent=0 // pred_fallthru
    _
  // Predicated region
  $region10: #{gcn_encoder_forward.1} parent=0 // pred_check
    _
  $region11: #{gcn_encoder_forward.1} parent=0 // pred_check_branch
    %18 = sbr.rel (0) target = $region13
  $region12: #{gcn_encoder_forward.1} parent=0 // pred_region
    _
  $region13: #{gcn_encoder_forward.1} parent=0 // pred_fallthru
    _
  // Predicated region
  $region14: #{gcn_encoder_forward.1} parent=0 // pred_check
    _
  $region15: #{gcn_encoder_forward.1} parent=0 // pred_check_branch
    %20 = sbr.rel (0) target = $region17
  $region16: #{gcn_encoder_forward.1} parent=0 // pred_region
    _
  $region17: #{gcn_encoder_forward.1} parent=0 // pred_fallthru
    _
  // Predicated region
  $region18: #{gcn_encoder_forward.1} parent=0 // pred_check
    _
  $region19: #{gcn_encoder_forward.1} parent=0 // pred_check_branch
    %22 = sbr.rel (0) target = $region21
  $region20: #{gcn_encoder_forward.1} parent=0 // pred_region
    _
  $region21: #{gcn_encoder_forward.1} parent=0 // pred_fallthru
    _
  // Predicated region
  $region22: #{gcn_encoder_forward.1} parent=0 // pred_check
    _
  $region23: #{gcn_encoder_forward.1} parent=0 // pred_check_branch
    %24 = sbr.rel (0) target = $region25
  $region24: #{gcn_encoder_forward.1} parent=0 // pred_region
    _
  $region25: #{gcn_encoder_forward.1} parent=0 // pred_fallthru
    _
  // Predicated region
  $region26: #{gcn_encoder_forward.1} parent=0 // pred_check
    _
  $region27: #{gcn_encoder_forward.1} parent=0 // pred_check_branch
    %26 = sbr.rel (0) target = $region29
  $region28: #{gcn_encoder_forward.1} parent=0 // pred_region
    _
  $region29: #{gcn_encoder_forward.1} parent=0 // pred_fallthru
    _
  // Predicated region
  $region30: #{gcn_encoder_forward.1} parent=0 // pred_check
    _
  $region31: #{gcn_encoder_forward.1} parent=0 // pred_check_branch
    %28 = sbr.rel (0) target = $region33
  $region32: #{gcn_encoder_forward.1} parent=0 // pred_region
    _
  $region33: #{gcn_encoder_forward.1} parent=0 // pred_fallthru
    _
  %v30 = vld [vmem:[%s0] sm:$0xff]
  %v31 = vld [vmem:[%s0 + $0x8] sm:$0xff]
  %v32 = vld [vmem:[%s0 + $0x10] sm:$0xff]
  %v33 = vld [vmem:[%s0 + $0x18] sm:$0xff]
  %v34 = vld [vmem:[%s0 + $0x20] sm:$0xff]
  %v35 = vld [vmem:[%s0 + $0x28] sm:$0xff]
  %v36 = vld [vmem:[%s0 + $0x30] sm:$0xff]
  %v37 = vld [vmem:[%s0 + $0x38] sm:$0xff]
  %v38 = vld [vmem:[%s0 + $0x40] sm:$0xff]
  %v39 = vld [vmem:[%s0 + $0x48] sm:$0xff]
  %v40 = vld [vmem:[%s0 + $0x50] sm:$0xff]
  %v41 = vld [vmem:[%s0 + $0x58] sm:$0xff]
  %v42 = vld [vmem:[%s0 + $0x60] sm:$0xff]
  %v43 = vld [vmem:[%s0 + $0x68] sm:$0xff]
  %v44 = vld [vmem:[%s0 + $0x70] sm:$0xff]
  %v45 = vld [vmem:[%s0 + $0x78] sm:$0xff]
  %v46 = vld [vmem:[%s0 + $0x80] sm:$0xff]
  %v47 = vld [vmem:[%s0 + $0x88] sm:$0xff]
  %v48 = vld [vmem:[%s0 + $0x90] sm:$0xff]
  %v49 = vld [vmem:[%s0 + $0x98] sm:$0xff]
  %v50 = vld [vmem:[%s0 + $0xa0] sm:$0xff]
  %v51 = vld [vmem:[%s0 + $0xa8] sm:$0xff]
  %v52 = vld [vmem:[%s0 + $0xb0] sm:$0xff]
  %v53 = vld [vmem:[%s0 + $0xb8] sm:$0xff]
  %v54 = vld [vmem:[%s0 + $0xc0] sm:$0xff]
  %v55 = vld [vmem:[%s0 + $0xc8] sm:$0xff]
  %v56 = vld [vmem:[%s0 + $0xd0] sm:$0xff]
  %v57 = vld [vmem:[%s0 + $0xd8] sm:$0xff]
  %v58 = vld [vmem:[%s0 + $0xe0] sm:$0xff]
  %v59 = vld [vmem:[%s0 + $0xe8] sm:$0xff]
  %v60 = vld [vmem:[%s0 + $0xf0] sm:$0xff]
  %v61 = vld [vmem:[%s0 + $0xf8] sm:$0xff]
  %v62 = vld [vmem:[%s1] sm:$0xf]
  %v63 = vld [vmem:[%s1 + $0x4] sm:$0xf]
  %v64 = vld [vmem:[%s1 + $0x8] sm:$0xf]
  %v65 = vld [vmem:[%s1 + $0xc] sm:$0xf]
  %v66 = vld [vmem:[%s1 + $0x10] sm:$0xf]
  %v67 = vld [vmem:[%s1 + $0x14] sm:$0xf]
  %v68 = vld [vmem:[%s1 + $0x18] sm:$0xf]
  %v69 = vld [vmem:[%s1 + $0x1c] sm:$0xf]
  %v70 = vld [vmem:[%s1 + $0x20] sm:$0xf]
  %v71 = vld [vmem:[%s1 + $0x24] sm:$0xf]
  %v72 = vld [vmem:[%s1 + $0x28] sm:$0xf]
  %v73 = vld [vmem:[%s1 + $0x2c] sm:$0xf]
  %v74 = vld [vmem:[%s1 + $0x30] sm:$0xf]
  %v75 = vld [vmem:[%s1 + $0x34] sm:$0xf]
  %v76 = vld [vmem:[%s1 + $0x38] sm:$0xf]
  %v77 = vld [vmem:[%s1 + $0x3c] sm:$0xf]
  %v78 = vld [vmem:[%s1 + $0x40] sm:$0xf]
  %v79 = vld [vmem:[%s1 + $0x44] sm:$0xf]
  %v80 = vld [vmem:[%s1 + $0x48] sm:$0xf]
  %v81 = vld [vmem:[%s1 + $0x4c] sm:$0xf]
  %v82 = vld [vmem:[%s1 + $0x50] sm:$0xf]
  %v83 = vld [vmem:[%s1 + $0x54] sm:$0xf]
  %v84 = vld [vmem:[%s1 + $0x58] sm:$0xf]
  %v85 = vld [vmem:[%s1 + $0x5c] sm:$0xf]
  %v86 = vld [vmem:[%s1 + $0x60] sm:$0xf]
  %v87 = vld [vmem:[%s1 + $0x64] sm:$0xf]
  %v88 = vld [vmem:[%s1 + $0x68] sm:$0xf]
  %v89 = vld [vmem:[%s1 + $0x6c] sm:$0xf]
  %v90 = vld [vmem:[%s1 + $0x70] sm:$0xf]
  %v91 = vld [vmem:[%s1 + $0x74] sm:$0xf]
  %v92 = vld [vmem:[%s1 + $0x78] sm:$0xf]
  %v93 = vld [vmem:[%s1 + $0x7c] sm:$0xf]
  %v126 = vunpack.c.l.b16 %v30
  %v127 = vunpack.c.h.b16 %v30
  %v128 = vunpack.c.l.b16 %v31
  %v129 = vunpack.c.h.b16 %v31
  %v130 = vunpack.c.l.b16 %v32
  %v131 = vunpack.c.h.b16 %v32
  %v132 = vunpack.c.l.b16 %v33
  %v133 = vunpack.c.h.b16 %v33
  %v134 = vunpack.c.l.b16 %v34
  %v135 = vunpack.c.h.b16 %v34
  %v136 = vunpack.c.l.b16 %v35
  %v137 = vunpack.c.h.b16 %v35
  %v138 = vunpack.c.l.b16 %v36
  %v139 = vunpack.c.h.b16 %v36
  %v140 = vunpack.c.l.b16 %v37
  %v141 = vunpack.c.h.b16 %v37
  %v142 = vunpack.c.l.b16 %v38
  %v143 = vunpack.c.h.b16 %v38
  %v144 = vunpack.c.l.b16 %v39
  %v145 = vunpack.c.h.b16 %v39
  %v146 = vunpack.c.l.b16 %v40
  %v147 = vunpack.c.h.b16 %v40
  %v148 = vunpack.c.l.b16 %v41
  %v149 = vunpack.c.h.b16 %v41
  %v150 = vunpack.c.l.b16 %v42
  %v151 = vunpack.c.h.b16 %v42
  %v152 = vunpack.c.l.b16 %v43
  %v153 = vunpack.c.h.b16 %v43
  %v154 = vunpack.c.l.b16 %v44
  %v155 = vunpack.c.h.b16 %v44
  %v156 = vunpack.c.l.b16 %v45
  %v157 = vunpack.c.h.b16 %v45
  %v158 = vunpack.c.l.b16 %v46
  %v159 = vunpack.c.h.b16 %v46
  %v160 = vunpack.c.l.b16 %v47
  %v161 = vunpack.c.h.b16 %v47
  %v162 = vunpack.c.l.b16 %v48
  %v163 = vunpack.c.h.b16 %v48
  %v164 = vunpack.c.l.b16 %v49
  %v165 = vunpack.c.h.b16 %v49
  %v166 = vunpack.c.l.b16 %v50
  %v167 = vunpack.c.h.b16 %v50
  %v168 = vunpack.c.l.b16 %v51
  %v169 = vunpack.c.h.b16 %v51
  %v170 = vunpack.c.l.b16 %v52
  %v171 = vunpack.c.h.b16 %v52
  %v172 = vunpack.c.l.b16 %v53
  %v173 = vunpack.c.h.b16 %v53
  %v174 = vunpack.c.l.b16 %v54
  %v175 = vunpack.c.h.b16 %v54
  %v176 = vunpack.c.l.b16 %v55
  %v177 = vunpack.c.h.b16 %v55
  %v178 = vunpack.c.l.b16 %v56
  %v179 = vunpack.c.h.b16 %v56
  %v180 = vunpack.c.l.b16 %v57
  %v181 = vunpack.c.h.b16 %v57
  %v182 = vunpack.c.l.b16 %v58
  %v183 = vunpack.c.h.b16 %v58
  %v184 = vunpack.c.l.b16 %v59
  %v185 = vunpack.c.h.b16 %v59
  %v186 = vunpack.c.l.b16 %v60
  %v187 = vunpack.c.h.b16 %v60
  %v188 = vunpack.c.l.b16 %v61
  %v189 = vunpack.c.h.b16 %v61
  %v190 = vpack.c.b16 %v128, %v126
  %v191 = vpack.c.b16 %v129, %v127
  %v192 = vpack.c.b16 %v132, %v130
  %v193 = vpack.c.b16 %v133, %v131
  %v194 = vpack.c.b16 %v136, %v134
  %v195 = vpack.c.b16 %v137, %v135
  %v196 = vpack.c.b16 %v140, %v138
  %v197 = vpack.c.b16 %v141, %v139
  %v198 = vpack.c.b16 %v144, %v142
  %v199 = vpack.c.b16 %v145, %v143
  %v200 = vpack.c.b16 %v148, %v146
  %v201 = vpack.c.b16 %v149, %v147
  %v202 = vpack.c.b16 %v152, %v150
  %v203 = vpack.c.b16 %v153, %v151
  %v204 = vpack.c.b16 %v156, %v154
  %v205 = vpack.c.b16 %v157, %v155
  %v206 = vpack.c.b16 %v160, %v158
  %v207 = vpack.c.b16 %v161, %v159
  %v208 = vpack.c.b16 %v164, %v162
  %v209 = vpack.c.b16 %v165, %v163
  %v210 = vpack.c.b16 %v168, %v166
  %v211 = vpack.c.b16 %v169, %v167
  %v212 = vpack.c.b16 %v172, %v170
  %v213 = vpack.c.b16 %v173, %v171
  %v214 = vpack.c.b16 %v176, %v174
  %v215 = vpack.c.b16 %v177, %v175
  %v216 = vpack.c.b16 %v180, %v178
  %v217 = vpack.c.b16 %v181, %v179
  %v218 = vpack.c.b16 %v184, %v182
  %v219 = vpack.c.b16 %v185, %v183
  %v220 = vpack.c.b16 %v188, %v186
  %v221 = vpack.c.b16 %v189, %v187
  %v286 = vunpack.c.l.b16 %v62
  %v287 = vunpack.c.l.b16 %v63
  %v288 = vunpack.c.l.b16 %v64
  %v289 = vunpack.c.l.b16 %v65
  %v290 = vunpack.c.l.b16 %v66
  %v291 = vunpack.c.l.b16 %v67
  %v292 = vunpack.c.l.b16 %v68
  %v293 = vunpack.c.l.b16 %v69
  %v294 = vunpack.c.l.b16 %v70
  %v295 = vunpack.c.l.b16 %v71
  %v296 = vunpack.c.l.b16 %v72
  %v297 = vunpack.c.l.b16 %v73
  %v298 = vunpack.c.l.b16 %v74
  %v299 = vunpack.c.l.b16 %v75
  %v300 = vunpack.c.l.b16 %v76
  %v301 = vunpack.c.l.b16 %v77
  %v302 = vunpack.c.l.b16 %v78
  %v303 = vunpack.c.l.b16 %v79
  %v304 = vunpack.c.l.b16 %v80
  %v305 = vunpack.c.l.b16 %v81
  %v306 = vunpack.c.l.b16 %v82
  %v307 = vunpack.c.l.b16 %v83
  %v308 = vunpack.c.l.b16 %v84
  %v309 = vunpack.c.l.b16 %v85
  %v310 = vunpack.c.l.b16 %v86
  %v311 = vunpack.c.l.b16 %v87
  %v312 = vunpack.c.l.b16 %v88
  %v313 = vunpack.c.l.b16 %v89
  %v314 = vunpack.c.l.b16 %v90
  %v315 = vunpack.c.l.b16 %v91
  %v316 = vunpack.c.l.b16 %v92
  %v317 = vunpack.c.l.b16 %v93
  %v318 = vpack.c.b16 %v287, %v286
  %v319 = vpack.c.b16 %v289, %v288
  %v320 = vpack.c.b16 %v291, %v290
  %v321 = vpack.c.b16 %v293, %v292
  %v322 = vpack.c.b16 %v295, %v294
  %v323 = vpack.c.b16 %v297, %v296
  %v324 = vpack.c.b16 %v299, %v298
  %v325 = vpack.c.b16 %v301, %v300
  %v326 = vpack.c.b16 %v303, %v302
  %v327 = vpack.c.b16 %v305, %v304
  %v328 = vpack.c.b16 %v307, %v306
  %v329 = vpack.c.b16 %v309, %v308
  %v330 = vpack.c.b16 %v311, %v310
  %v331 = vpack.c.b16 %v313, %v312
  %v332 = vpack.c.b16 %v315, %v314
  %v333 = vpack.c.b16 %v317, %v316
  %350 = vmatprep.subr.bf16.mxu0 0
  %351 = vmatpush1.bf16.msra.mxu0 %v325
  %352 = vmatprep.subr.bf16.mxu0 0
  %353 = vmatpush1.bf16.msra.mxu0 %v324
  %354 = vmatprep.subr.bf16.mxu0 0
  %355 = vmatpush1.bf16.msra.mxu0 %v323
  %356 = vmatprep.subr.bf16.mxu0 0
  %357 = vmatpush1.bf16.msra.mxu0 %v322
  %358 = vmatprep.subr.bf16.mxu0 0
  %359 = vmatpush1.bf16.msra.mxu0 %v321
  %360 = vmatprep.subr.bf16.mxu0 0
  %361 = vmatpush1.bf16.msra.mxu0 %v320
  %362 = vmatprep.subr.bf16.mxu0 0
  %363 = vmatpush1.bf16.msra.mxu0 %v319
  %364 = vmatprep.subr.bf16.mxu0 0
  %365 = vmatpush1.bf16.msra.mxu0 %v318
  %366 = vmatprep.subr.bf16.mxu0 0
  %367 = vmatpush2.bf16.msra.mxu0 %v333
  %368 = vmatprep.subr.bf16.mxu0 0
  %369 = vmatpush2.bf16.msra.mxu0 %v332
  %370 = vmatprep.subr.bf16.mxu0 0
  %371 = vmatpush2.bf16.msra.mxu0 %v331
  %372 = vmatprep.subr.bf16.mxu0 0
  %373 = vmatpush2.bf16.msra.mxu0 %v330
  %374 = vmatprep.subr.bf16.mxu0 0
  %375 = vmatpush2.bf16.msra.mxu0 %v329
  %376 = vmatprep.subr.bf16.mxu0 0
  %377 = vmatpush2.bf16.msra.mxu0 %v328
  %378 = vmatprep.subr.bf16.mxu0 0
  %379 = vmatpush2.bf16.msra.mxu0 %v327
  %380 = vmatprep.subr.bf16.mxu0 0
  %381 = vmatpush2.bf16.msra.mxu0 %v326
  %382 = vmatprep.mubr.bf16.mxu0 %v191
  %383 = vmatmul.mubr.bf16.gmra.mxu0 %v190
  %v384 = vpop.f32.mrf.mxu0
  %v385 = vadd.f32 0.0, %v384
  %v386 = vpop.f32.mrf.mxu0
  %v387 = vpop.f32.mrf.mxu0
  %v388 = vadd.f32 0.0, %v387
  %v389 = vpop.f32.mrf.mxu0
  %390 = vmatprep.mubr.bf16.mxu0 %v193
  %391 = vmatmul.mubr.bf16.gmra.mxu0 %v192
  %v392 = vpop.f32.mrf.mxu0
  %v393 = vadd.f32 0.0, %v392
  %v394 = vpop.f32.mrf.mxu0
  %v395 = vpop.f32.mrf.mxu0
  %v396 = vadd.f32 0.0, %v395
  %v397 = vpop.f32.mrf.mxu0
  %398 = vmatprep.mubr.bf16.mxu0 %v195
  %399 = vmatmul.mubr.bf16.gmra.mxu0 %v194
  %v400 = vpop.f32.mrf.mxu0
  %v401 = vadd.f32 0.0, %v400
  %v402 = vpop.f32.mrf.mxu0
  %v403 = vpop.f32.mrf.mxu0
  %v404 = vadd.f32 0.0, %v403
  %v405 = vpop.f32.mrf.mxu0
  %406 = vmatprep.mubr.bf16.mxu0 %v197
  %407 = vmatmul.mubr.bf16.gmra.mxu0 %v196
  %v408 = vpop.f32.mrf.mxu0
  %v409 = vadd.f32 0.0, %v408
  %v410 = vpop.f32.mrf.mxu0
  %v411 = vpop.f32.mrf.mxu0
  %v412 = vadd.f32 0.0, %v411
  %v413 = vpop.f32.mrf.mxu0
  %414 = vmatprep.mubr.bf16.mxu0 %v199
  %415 = vmatmul.mubr.bf16.gmra.mxu0 %v198
  %v416 = vpop.f32.mrf.mxu0
  %v417 = vadd.f32 0.0, %v416
  %v418 = vpop.f32.mrf.mxu0
  %v419 = vpop.f32.mrf.mxu0
  %v420 = vadd.f32 0.0, %v419
  %v421 = vpop.f32.mrf.mxu0
  %422 = vmatprep.mubr.bf16.mxu0 %v201
  %423 = vmatmul.mubr.bf16.gmra.mxu0 %v200
  %v424 = vpop.f32.mrf.mxu0
  %v425 = vadd.f32 0.0, %v424
  %v426 = vpop.f32.mrf.mxu0
  %v427 = vpop.f32.mrf.mxu0
  %v428 = vadd.f32 0.0, %v427
  %v429 = vpop.f32.mrf.mxu0
  %430 = vmatprep.mubr.bf16.mxu0 %v203
  %431 = vmatmul.mubr.bf16.gmra.mxu0 %v202
  %v432 = vpop.f32.mrf.mxu0
  %v433 = vadd.f32 0.0, %v432
  %v434 = vpop.f32.mrf.mxu0
  %v435 = vpop.f32.mrf.mxu0
  %v436 = vadd.f32 0.0, %v435
  %v437 = vpop.f32.mrf.mxu0
  %438 = vmatprep.mubr.bf16.mxu0 %v205
  %439 = vmatmul.mubr.bf16.gmra.mxu0 %v204
  %v440 = vpop.f32.mrf.mxu0
  %v441 = vadd.f32 0.0, %v440
  %v442 = vpop.f32.mrf.mxu0
  %v443 = vpop.f32.mrf.mxu0
  %v444 = vadd.f32 0.0, %v443
  %v445 = vpop.f32.mrf.mxu0
  %446 = vmatprep.mubr.bf16.mxu0 %v207
  %447 = vmatmul.mubr.bf16.gmra.mxu0 %v206
  %v448 = vpop.f32.mrf.mxu0
  %v449 = vadd.f32 0.0, %v448
  %v450 = vpop.f32.mrf.mxu0
  %v451 = vpop.f32.mrf.mxu0
  %v452 = vadd.f32 0.0, %v451
  %v453 = vpop.f32.mrf.mxu0
  %454 = vmatprep.mubr.bf16.mxu0 %v209
  %455 = vmatmul.mubr.bf16.gmra.mxu0 %v208
  %v456 = vpop.f32.mrf.mxu0
  %v457 = vadd.f32 0.0, %v456
  %v458 = vpop.f32.mrf.mxu0
  %v459 = vpop.f32.mrf.mxu0
  %v460 = vadd.f32 0.0, %v459
  %v461 = vpop.f32.mrf.mxu0
  %462 = vmatprep.mubr.bf16.mxu0 %v211
  %463 = vmatmul.mubr.bf16.gmra.mxu0 %v210
  %v464 = vpop.f32.mrf.mxu0
  %v465 = vadd.f32 0.0, %v464
  %v466 = vpop.f32.mrf.mxu0
  %v467 = vpop.f32.mrf.mxu0
  %v468 = vadd.f32 0.0, %v467
  %v469 = vpop.f32.mrf.mxu0
  %470 = vmatprep.mubr.bf16.mxu0 %v213
  %471 = vmatmul.mubr.bf16.gmra.mxu0 %v212
  %v472 = vpop.f32.mrf.mxu0
  %v473 = vadd.f32 0.0, %v472
  %v474 = vpop.f32.mrf.mxu0
  %v475 = vpop.f32.mrf.mxu0
  %v476 = vadd.f32 0.0, %v475
  %v477 = vpop.f32.mrf.mxu0
  %478 = vmatprep.mubr.bf16.mxu0 %v215
  %479 = vmatmul.mubr.bf16.gmra.mxu0 %v214
  %v480 = vpop.f32.mrf.mxu0
  %v481 = vadd.f32 0.0, %v480
  %v482 = vpop.f32.mrf.mxu0
  %v483 = vpop.f32.mrf.mxu0
  %v484 = vadd.f32 0.0, %v483
  %v485 = vpop.f32.mrf.mxu0
  %486 = vmatprep.mubr.bf16.mxu0 %v217
  %487 = vmatmul.mubr.bf16.gmra.mxu0 %v216
  %v488 = vpop.f32.mrf.mxu0
  %v489 = vadd.f32 0.0, %v488
  %v490 = vpop.f32.mrf.mxu0
  %v491 = vpop.f32.mrf.mxu0
  %v492 = vadd.f32 0.0, %v491
  %v493 = vpop.f32.mrf.mxu0
  %494 = vmatprep.mubr.bf16.mxu0 %v219
  %495 = vmatmul.mubr.bf16.gmra.mxu0 %v218
  %v496 = vpop.f32.mrf.mxu0
  %v497 = vadd.f32 0.0, %v496
  %v498 = vpop.f32.mrf.mxu0
  %v499 = vpop.f32.mrf.mxu0
  %v500 = vadd.f32 0.0, %v499
  %v501 = vpop.f32.mrf.mxu0
  %502 = vmatprep.mubr.bf16.mxu0 %v221
  %503 = vmatmul.mubr.bf16.gmra.mxu0 %v220
  %v504 = vpop.f32.mrf.mxu0
  %v505 = vadd.f32 0.0, %v504
  %v506 = vpop.f32.mrf.mxu0
  %v507 = vpop.f32.mrf.mxu0
  %v508 = vadd.f32 0.0, %v507
  %v509 = vpop.f32.mrf.mxu0
  %510 = vdwg.mxu0
  %v511 = vld [vmem:[%s2] sm:$0xff]
  %v512 = vld [vmem:[%s2 + $0x8] sm:$0xff]
  %v513 = vld [vmem:[%s2 + $0x10] sm:$0xff]
  %v514 = vld [vmem:[%s2 + $0x18] sm:$0xff]
  %v515 = vld [vmem:[%s2 + $0x20] sm:$0xff]
  %v516 = vld [vmem:[%s2 + $0x28] sm:$0xff]
  %v517 = vld [vmem:[%s2 + $0x30] sm:$0xff]
  %v518 = vld [vmem:[%s2 + $0x38] sm:$0xff]
  %v519 = vld [vmem:[%s2 + $0x40] sm:$0xff]
  %v520 = vld [vmem:[%s2 + $0x48] sm:$0xff]
  %v521 = vld [vmem:[%s2 + $0x50] sm:$0xff]
  %v522 = vld [vmem:[%s2 + $0x58] sm:$0xff]
  %v523 = vld [vmem:[%s2 + $0x60] sm:$0xff]
  %v524 = vld [vmem:[%s2 + $0x68] sm:$0xff]
  %v525 = vld [vmem:[%s2 + $0x70] sm:$0xff]
  %v526 = vld [vmem:[%s2 + $0x78] sm:$0xff]
  %v527 = vld [vmem:[%s3] sm:$0x1]
  %v529 = vlaneseq
  %v530 = vshrl.u32 %v529, 7
  %v531 = vsub.s32 0, %v530
  %v532 = vrot.slane %v527, %v531
  %534 = vmatprep.subr.mxu0 0.0
  %535 = vmatpush1.msra.mxu0 %v526
  %536 = vmatprep.subr.mxu0 0.0
  %537 = vmatpush1.msra.mxu0 %v525
  %538 = vmatprep.subr.mxu0 0.0
  %539 = vmatpush1.msra.mxu0 %v524
  %540 = vmatprep.subr.mxu0 0.0
  %541 = vmatpush1.msra.mxu0 %v523
  %542 = vmatprep.subr.mxu0 0.0
  %543 = vmatpush1.msra.mxu0 %v522
  %544 = vmatprep.subr.mxu0 0.0
  %545 = vmatpush1.msra.mxu0 %v521
  %546 = vmatprep.subr.mxu0 0.0
  %547 = vmatpush1.msra.mxu0 %v520
  %548 = vmatprep.subr.mxu0 0.0
  %549 = vmatpush1.msra.mxu0 %v519
  %550 = vmatprep.subr.mxu0 0.0
  %551 = vmatpush1.msra.mxu0 %v518
  %552 = vmatprep.subr.mxu0 0.0
  %553 = vmatpush1.msra.mxu0 %v517
  %554 = vmatprep.subr.mxu0 0.0
  %555 = vmatpush1.msra.mxu0 %v516
  %556 = vmatprep.subr.mxu0 0.0
  %557 = vmatpush1.msra.mxu0 %v515
  %558 = vmatprep.subr.mxu0 0.0
  %559 = vmatpush1.msra.mxu0 %v514
  %560 = vmatprep.subr.mxu0 0.0
  %561 = vmatpush1.msra.mxu0 %v513
  %562 = vmatprep.subr.mxu0 0.0
  %563 = vmatpush1.msra.mxu0 %v512
  %564 = vmatprep.subr.mxu0 0.0
  %565 = vmatpush1.msra.mxu0 %v511
  %566 = vmatprep.subr.mxu0 0.0
  %567 = vmatpush2.msra.mxu0 0.0
  %568 = vmatprep.subr.mxu0 0.0
  %569 = vmatpush2.msra.mxu0 0.0
  %570 = vmatprep.subr.mxu0 0.0
  %571 = vmatpush2.msra.mxu0 0.0
  %572 = vmatprep.subr.mxu0 0.0
  %573 = vmatpush2.msra.mxu0 0.0
  %574 = vmatprep.subr.mxu0 0.0
  %575 = vmatpush2.msra.mxu0 0.0
  %576 = vmatprep.subr.mxu0 0.0
  %577 = vmatpush2.msra.mxu0 0.0
  %578 = vmatprep.subr.mxu0 0.0
  %579 = vmatpush2.msra.mxu0 0.0
  %580 = vmatprep.subr.mxu0 0.0
  %581 = vmatpush2.msra.mxu0 0.0
  %582 = vmatprep.subr.mxu0 0.0
  %583 = vmatpush2.msra.mxu0 0.0
  %584 = vmatprep.subr.mxu0 0.0
  %585 = vmatpush2.msra.mxu0 0.0
  %586 = vmatprep.subr.mxu0 0.0
  %587 = vmatpush2.msra.mxu0 0.0
  %588 = vmatprep.subr.mxu0 0.0
  %589 = vmatpush2.msra.mxu0 0.0
  %590 = vmatprep.subr.mxu0 0.0
  %591 = vmatpush2.msra.mxu0 0.0
  %592 = vmatprep.subr.mxu0 0.0
  %593 = vmatpush2.msra.mxu0 0.0
  %594 = vmatprep.subr.mxu0 0.0
  %595 = vmatpush2.msra.mxu0 0.0
  %596 = vmatprep.subr.mxu0 0.0
  %597 = vmatpush2.msra.mxu0 0.0
  %598 = vmatprep.mubr.f32.mxu0 0.0
  %599 = vmatmul.mubr.f32.gmra.mxu0 %v385
  %v600 = vpop.f32.mrf.mxu0
  %v601 = vadd.f32 %v532, %v600
  %v602 = vpop.f32.mrf.mxu0
  %603 = vmatprep.mubr.f32.mxu0 0.0
  %604 = vmatmul.mubr.f32.gmra.mxu0 %v388
  %v605 = vpop.f32.mrf.mxu0
  %v606 = vadd.f32 %v532, %v605
  %v607 = vpop.f32.mrf.mxu0
  %608 = vmatprep.mubr.f32.mxu0 0.0
  %609 = vmatmul.mubr.f32.gmra.mxu0 %v393
  %v610 = vpop.f32.mrf.mxu0
  %v611 = vadd.f32 %v532, %v610
  %v612 = vpop.f32.mrf.mxu0
  %613 = vmatprep.mubr.f32.mxu0 0.0
  %614 = vmatmul.mubr.f32.gmra.mxu0 %v396
  %v615 = vpop.f32.mrf.mxu0
  %v616 = vadd.f32 %v532, %v615
  %v617 = vpop.f32.mrf.mxu0
  %618 = vmatprep.mubr.f32.mxu0 0.0
  %619 = vmatmul.mubr.f32.gmra.mxu0 %v401
  %v620 = vpop.f32.mrf.mxu0
  %v621 = vadd.f32 %v532, %v620
  %v622 = vpop.f32.mrf.mxu0
  %623 = vmatprep.mubr.f32.mxu0 0.0
  %624 = vmatmul.mubr.f32.gmra.mxu0 %v404
  %v625 = vpop.f32.mrf.mxu0
  %v626 = vadd.f32 %v532, %v625
  %v627 = vpop.f32.mrf.mxu0
  %628 = vmatprep.mubr.f32.mxu0 0.0
  %629 = vmatmul.mubr.f32.gmra.mxu0 %v409
  %v630 = vpop.f32.mrf.mxu0
  %v631 = vadd.f32 %v532, %v630
  %v632 = vpop.f32.mrf.mxu0
  %633 = vmatprep.mubr.f32.mxu0 0.0
  %634 = vmatmul.mubr.f32.gmra.mxu0 %v412
  %v635 = vpop.f32.mrf.mxu0
  %v636 = vadd.f32 %v532, %v635
  %v637 = vpop.f32.mrf.mxu0
  %638 = vmatprep.mubr.f32.mxu0 0.0
  %639 = vmatmul.mubr.f32.gmra.mxu0 %v417
  %v640 = vpop.f32.mrf.mxu0
  %v641 = vadd.f32 %v532, %v640
  %v642 = vpop.f32.mrf.mxu0
  %643 = vmatprep.mubr.f32.mxu0 0.0
  %644 = vmatmul.mubr.f32.gmra.mxu0 %v420
  %v645 = vpop.f32.mrf.mxu0
  %v646 = vadd.f32 %v532, %v645
  %v647 = vpop.f32.mrf.mxu0
  %648 = vmatprep.mubr.f32.mxu0 0.0
  %649 = vmatmul.mubr.f32.gmra.mxu0 %v425
  %v650 = vpop.f32.mrf.mxu0
  %v651 = vadd.f32 %v532, %v650
  %v652 = vpop.f32.mrf.mxu0
  %653 = vmatprep.mubr.f32.mxu0 0.0
  %654 = vmatmul.mubr.f32.gmra.mxu0 %v428
  %v655 = vpop.f32.mrf.mxu0
  %v656 = vadd.f32 %v532, %v655
  %v657 = vpop.f32.mrf.mxu0
  %658 = vmatprep.mubr.f32.mxu0 0.0
  %659 = vmatmul.mubr.f32.gmra.mxu0 %v433
  %v660 = vpop.f32.mrf.mxu0
  %v661 = vadd.f32 %v532, %v660
  %v662 = vpop.f32.mrf.mxu0
  %663 = vmatprep.mubr.f32.mxu0 0.0
  %664 = vmatmul.mubr.f32.gmra.mxu0 %v436
  %v665 = vpop.f32.mrf.mxu0
  %v666 = vadd.f32 %v532, %v665
  %v667 = vpop.f32.mrf.mxu0
  %668 = vmatprep.mubr.f32.mxu0 0.0
  %669 = vmatmul.mubr.f32.gmra.mxu0 %v441
  %v670 = vpop.f32.mrf.mxu0
  %v671 = vadd.f32 %v532, %v670
  %v672 = vpop.f32.mrf.mxu0
  %673 = vmatprep.mubr.f32.mxu0 0.0
  %674 = vmatmul.mubr.f32.gmra.mxu0 %v444
  %v675 = vpop.f32.mrf.mxu0
  %v676 = vadd.f32 %v532, %v675
  %v677 = vpop.f32.mrf.mxu0
  %678 = vmatprep.mubr.f32.mxu0 0.0
  %679 = vmatmul.mubr.f32.gmra.mxu0 %v449
  %v680 = vpop.f32.mrf.mxu0
  %v681 = vadd.f32 %v532, %v680
  %v682 = vpop.f32.mrf.mxu0
  %683 = vmatprep.mubr.f32.mxu0 0.0
  %684 = vmatmul.mubr.f32.gmra.mxu0 %v452
  %v685 = vpop.f32.mrf.mxu0
  %v686 = vadd.f32 %v532, %v685
  %v687 = vpop.f32.mrf.mxu0
  %688 = vmatprep.mubr.f32.mxu0 0.0
  %689 = vmatmul.mubr.f32.gmra.mxu0 %v457
  %v690 = vpop.f32.mrf.mxu0
  %v691 = vadd.f32 %v532, %v690
  %v692 = vpop.f32.mrf.mxu0
  %693 = vmatprep.mubr.f32.mxu0 0.0
  %694 = vmatmul.mubr.f32.gmra.mxu0 %v460
  %v695 = vpop.f32.mrf.mxu0
  %v696 = vadd.f32 %v532, %v695
  %v697 = vpop.f32.mrf.mxu0
  %698 = vmatprep.mubr.f32.mxu0 0.0
  %699 = vmatmul.mubr.f32.gmra.mxu0 %v465
  %v700 = vpop.f32.mrf.mxu0
  %v701 = vadd.f32 %v532, %v700
  %v702 = vpop.f32.mrf.mxu0
  %703 = vmatprep.mubr.f32.mxu0 0.0
  %704 = vmatmul.mubr.f32.gmra.mxu0 %v468
  %v705 = vpop.f32.mrf.mxu0
  %v706 = vadd.f32 %v532, %v705
  %v707 = vpop.f32.mrf.mxu0
  %708 = vmatprep.mubr.f32.mxu0 0.0
  %709 = vmatmul.mubr.f32.gmra.mxu0 %v473
  %v710 = vpop.f32.mrf.mxu0
  %v711 = vadd.f32 %v532, %v710
  %v712 = vpop.f32.mrf.mxu0
  %713 = vmatprep.mubr.f32.mxu0 0.0
  %714 = vmatmul.mubr.f32.gmra.mxu0 %v476
  %v715 = vpop.f32.mrf.mxu0
  %v716 = vadd.f32 %v532, %v715
  %v717 = vpop.f32.mrf.mxu0
  %718 = vmatprep.mubr.f32.mxu0 0.0
  %719 = vmatmul.mubr.f32.gmra.mxu0 %v481
  %v720 = vpop.f32.mrf.mxu0
  %v721 = vadd.f32 %v532, %v720
  %v722 = vpop.f32.mrf.mxu0
  %723 = vmatprep.mubr.f32.mxu0 0.0
  %724 = vmatmul.mubr.f32.gmra.mxu0 %v484
  %v725 = vpop.f32.mrf.mxu0
  %v726 = vadd.f32 %v532, %v725
  %v727 = vpop.f32.mrf.mxu0
  %728 = vmatprep.mubr.f32.mxu0 0.0
  %729 = vmatmul.mubr.f32.gmra.mxu0 %v489
  %v730 = vpop.f32.mrf.mxu0
  %v731 = vadd.f32 %v532, %v730
  %v732 = vpop.f32.mrf.mxu0
  %733 = vmatprep.mubr.f32.mxu0 0.0
  %734 = vmatmul.mubr.f32.gmra.mxu0 %v492
  %v735 = vpop.f32.mrf.mxu0
  %v736 = vadd.f32 %v532, %v735
  %v737 = vpop.f32.mrf.mxu0
  %738 = vmatprep.mubr.f32.mxu0 0.0
  %739 = vmatmul.mubr.f32.gmra.mxu0 %v497
  %v740 = vpop.f32.mrf.mxu0
  %v741 = vadd.f32 %v532, %v740
  %v742 = vpop.f32.mrf.mxu0
  %743 = vmatprep.mubr.f32.mxu0 0.0
  %744 = vmatmul.mubr.f32.gmra.mxu0 %v500
  %v745 = vpop.f32.mrf.mxu0
  %v746 = vadd.f32 %v532, %v745
  %v747 = vpop.f32.mrf.mxu0
  %748 = vmatprep.mubr.f32.mxu0 0.0
  %749 = vmatmul.mubr.f32.gmra.mxu0 %v505
  %v750 = vpop.f32.mrf.mxu0
  %v751 = vadd.f32 %v532, %v750
  %v752 = vpop.f32.mrf.mxu0
  %753 = vmatprep.mubr.f32.mxu0 0.0
  %754 = vmatmul.mubr.f32.gmra.mxu0 %v508
  %v755 = vpop.f32.mrf.mxu0
  %v756 = vadd.f32 %v532, %v755
  %v757 = vpop.f32.mrf.mxu0
  %758 = vdwg.mxu0
  %v759 = vmax.f32 %v601, 0.0
  %v760 = vmax.f32 %v606, 0.0
  %v761 = vmax.f32 %v611, 0.0
  %v762 = vmax.f32 %v616, 0.0
  %v763 = vmax.f32 %v621, 0.0
  %v764 = vmax.f32 %v626, 0.0
  %v765 = vmax.f32 %v631, 0.0
  %v766 = vmax.f32 %v636, 0.0
  %v767 = vmax.f32 %v641, 0.0
  %v768 = vmax.f32 %v646, 0.0
  %v769 = vmax.f32 %v651, 0.0
  %v770 = vmax.f32 %v656, 0.0
  %v771 = vmax.f32 %v661, 0.0
  %v772 = vmax.f32 %v666, 0.0
  %v773 = vmax.f32 %v671, 0.0
  %v774 = vmax.f32 %v676, 0.0
  %v775 = vmax.f32 %v681, 0.0
  %v776 = vmax.f32 %v686, 0.0
  %v777 = vmax.f32 %v691, 0.0
  %v778 = vmax.f32 %v696, 0.0
  %v779 = vmax.f32 %v701, 0.0
  %v780 = vmax.f32 %v706, 0.0
  %v781 = vmax.f32 %v711, 0.0
  %v782 = vmax.f32 %v716, 0.0
  %v783 = vmax.f32 %v721, 0.0
  %v784 = vmax.f32 %v726, 0.0
  %v785 = vmax.f32 %v731, 0.0
  %v786 = vmax.f32 %v736, 0.0
  %v787 = vmax.f32 %v741, 0.0
  %v788 = vmax.f32 %v746, 0.0
  %v789 = vmax.f32 %v751, 0.0
  %v790 = vmax.f32 %v756, 0.0
  %v791 = vpack.c.bf16 %v760, %v759
  %v792 = vpack.c.bf16 %v762, %v761
  %v793 = vpack.c.bf16 %v764, %v763
  %v794 = vpack.c.bf16 %v766, %v765
  %v795 = vpack.c.bf16 %v768, %v767
  %v796 = vpack.c.bf16 %v770, %v769
  %v797 = vpack.c.bf16 %v772, %v771
  %v798 = vpack.c.bf16 %v774, %v773
  %v799 = vpack.c.bf16 %v776, %v775
  %v800 = vpack.c.bf16 %v778, %v777
  %v801 = vpack.c.bf16 %v780, %v779
  %v802 = vpack.c.bf16 %v782, %v781
  %v803 = vpack.c.bf16 %v784, %v783
  %v804 = vpack.c.bf16 %v786, %v785
  %v805 = vpack.c.bf16 %v788, %v787
  %v806 = vpack.c.bf16 %v790, %v789
  %807 = vmatprep.subr.bf16.mxu0 0
  %808 = vmatpush1.bf16.msra.mxu0 %v798
  %809 = vmatprep.subr.bf16.mxu0 0
  %810 = vmatpush1.bf16.msra.mxu0 %v797
  %811 = vmatprep.subr.bf16.mxu0 0
  %812 = vmatpush1.bf16.msra.mxu0 %v796
  %813 = vmatprep.subr.bf16.mxu0 0
  %814 = vmatpush1.bf16.msra.mxu0 %v795
  %815 = vmatprep.subr.bf16.mxu0 0
  %816 = vmatpush1.bf16.msra.mxu0 %v794
  %817 = vmatprep.subr.bf16.mxu0 0
  %818 = vmatpush1.bf16.msra.mxu0 %v793
  %819 = vmatprep.subr.bf16.mxu0 0
  %820 = vmatpush1.bf16.msra.mxu0 %v792
  %821 = vmatprep.subr.bf16.mxu0 0
  %822 = vmatpush1.bf16.msra.mxu0 %v791
  %823 = vmatprep.subr.bf16.mxu0 0
  %824 = vmatpush2.bf16.msra.mxu0 %v806
  %825 = vmatprep.subr.bf16.mxu0 0
  %826 = vmatpush2.bf16.msra.mxu0 %v805
  %827 = vmatprep.subr.bf16.mxu0 0
  %828 = vmatpush2.bf16.msra.mxu0 %v804
  %829 = vmatprep.subr.bf16.mxu0 0
  %830 = vmatpush2.bf16.msra.mxu0 %v803
  %831 = vmatprep.subr.bf16.mxu0 0
  %832 = vmatpush2.bf16.msra.mxu0 %v802
  %833 = vmatprep.subr.bf16.mxu0 0
  %834 = vmatpush2.bf16.msra.mxu0 %v801
  %835 = vmatprep.subr.bf16.mxu0 0
  %836 = vmatpush2.bf16.msra.mxu0 %v800
  %837 = vmatprep.subr.bf16.mxu0 0
  %838 = vmatpush2.bf16.msra.mxu0 %v799
  %839 = vmatprep.mubr.bf16.mxu0 %v191
  %840 = vmatmul.mubr.bf16.gmra.mxu0 %v190
  %v841 = vpop.f32.mrf.mxu0
  %v842 = vadd.f32 0.0, %v841
  %v843 = vpop.f32.mrf.mxu0
  %v844 = vpop.f32.mrf.mxu0
  %v845 = vadd.f32 0.0, %v844
  %v846 = vpop.f32.mrf.mxu0
  %847 = vmatprep.mubr.bf16.mxu0 %v193
  %848 = vmatmul.mubr.bf16.gmra.mxu0 %v192
  %v849 = vpop.f32.mrf.mxu0
  %v850 = vadd.f32 0.0, %v849
  %v851 = vpop.f32.mrf.mxu0
  %v852 = vpop.f32.mrf.mxu0
  %v853 = vadd.f32 0.0, %v852
  %v854 = vpop.f32.mrf.mxu0
  %855 = vmatprep.mubr.bf16.mxu0 %v195
  %856 = vmatmul.mubr.bf16.gmra.mxu0 %v194
  %v857 = vpop.f32.mrf.mxu0
  %v858 = vadd.f32 0.0, %v857
  %v859 = vpop.f32.mrf.mxu0
  %v860 = vpop.f32.mrf.mxu0
  %v861 = vadd.f32 0.0, %v860
  %v862 = vpop.f32.mrf.mxu0
  %863 = vmatprep.mubr.bf16.mxu0 %v197
  %864 = vmatmul.mubr.bf16.gmra.mxu0 %v196
  %v865 = vpop.f32.mrf.mxu0
  %v866 = vadd.f32 0.0, %v865
  %v867 = vpop.f32.mrf.mxu0
  %v868 = vpop.f32.mrf.mxu0
  %v869 = vadd.f32 0.0, %v868
  %v870 = vpop.f32.mrf.mxu0
  %871 = vmatprep.mubr.bf16.mxu0 %v199
  %872 = vmatmul.mubr.bf16.gmra.mxu0 %v198
  %v873 = vpop.f32.mrf.mxu0
  %v874 = vadd.f32 0.0, %v873
  %v875 = vpop.f32.mrf.mxu0
  %v876 = vpop.f32.mrf.mxu0
  %v877 = vadd.f32 0.0, %v876
  %v878 = vpop.f32.mrf.mxu0
  %879 = vmatprep.mubr.bf16.mxu0 %v201
  %880 = vmatmul.mubr.bf16.gmra.mxu0 %v200
  %v881 = vpop.f32.mrf.mxu0
  %v882 = vadd.f32 0.0, %v881
  %v883 = vpop.f32.mrf.mxu0
  %v884 = vpop.f32.mrf.mxu0
  %v885 = vadd.f32 0.0, %v884
  %v886 = vpop.f32.mrf.mxu0
  %887 = vmatprep.mubr.bf16.mxu0 %v203
  %888 = vmatmul.mubr.bf16.gmra.mxu0 %v202
  %v889 = vpop.f32.mrf.mxu0
  %v890 = vadd.f32 0.0, %v889
  %v891 = vpop.f32.mrf.mxu0
  %v892 = vpop.f32.mrf.mxu0
  %v893 = vadd.f32 0.0, %v892
  %v894 = vpop.f32.mrf.mxu0
  %895 = vmatprep.mubr.bf16.mxu0 %v205
  %896 = vmatmul.mubr.bf16.gmra.mxu0 %v204
  %v897 = vpop.f32.mrf.mxu0
  %v898 = vadd.f32 0.0, %v897
  %v899 = vpop.f32.mrf.mxu0
  %v900 = vpop.f32.mrf.mxu0
  %v901 = vadd.f32 0.0, %v900
  %v902 = vpop.f32.mrf.mxu0
  %903 = vmatprep.mubr.bf16.mxu0 %v207
  %904 = vmatmul.mubr.bf16.gmra.mxu0 %v206
  %v905 = vpop.f32.mrf.mxu0
  %v906 = vadd.f32 0.0, %v905
  %v907 = vpop.f32.mrf.mxu0
  %v908 = vpop.f32.mrf.mxu0
  %v909 = vadd.f32 0.0, %v908
  %v910 = vpop.f32.mrf.mxu0
  %911 = vmatprep.mubr.bf16.mxu0 %v209
  %912 = vmatmul.mubr.bf16.gmra.mxu0 %v208
  %v913 = vpop.f32.mrf.mxu0
  %v914 = vadd.f32 0.0, %v913
  %v915 = vpop.f32.mrf.mxu0
  %v916 = vpop.f32.mrf.mxu0
  %v917 = vadd.f32 0.0, %v916
  %v918 = vpop.f32.mrf.mxu0
  %919 = vmatprep.mubr.bf16.mxu0 %v211
  %920 = vmatmul.mubr.bf16.gmra.mxu0 %v210
  %v921 = vpop.f32.mrf.mxu0
  %v922 = vadd.f32 0.0, %v921
  %v923 = vpop.f32.mrf.mxu0
  %v924 = vpop.f32.mrf.mxu0
  %v925 = vadd.f32 0.0, %v924
  %v926 = vpop.f32.mrf.mxu0
  %927 = vmatprep.mubr.bf16.mxu0 %v213
  %928 = vmatmul.mubr.bf16.gmra.mxu0 %v212
  %v929 = vpop.f32.mrf.mxu0
  %v930 = vadd.f32 0.0, %v929
  %v931 = vpop.f32.mrf.mxu0
  %v932 = vpop.f32.mrf.mxu0
  %v933 = vadd.f32 0.0, %v932
  %v934 = vpop.f32.mrf.mxu0
  %935 = vmatprep.mubr.bf16.mxu0 %v215
  %936 = vmatmul.mubr.bf16.gmra.mxu0 %v214
  %v937 = vpop.f32.mrf.mxu0
  %v938 = vadd.f32 0.0, %v937
  %v939 = vpop.f32.mrf.mxu0
  %v940 = vpop.f32.mrf.mxu0
  %v941 = vadd.f32 0.0, %v940
  %v942 = vpop.f32.mrf.mxu0
  %943 = vmatprep.mubr.bf16.mxu0 %v217
  %944 = vmatmul.mubr.bf16.gmra.mxu0 %v216
  %v945 = vpop.f32.mrf.mxu0
  %v946 = vadd.f32 0.0, %v945
  %v947 = vpop.f32.mrf.mxu0
  %v948 = vpop.f32.mrf.mxu0
  %v949 = vadd.f32 0.0, %v948
  %v950 = vpop.f32.mrf.mxu0
  %951 = vmatprep.mubr.bf16.mxu0 %v219
  %952 = vmatmul.mubr.bf16.gmra.mxu0 %v218
  %v953 = vpop.f32.mrf.mxu0
  %v954 = vadd.f32 0.0, %v953
  %v955 = vpop.f32.mrf.mxu0
  %v956 = vpop.f32.mrf.mxu0
  %v957 = vadd.f32 0.0, %v956
  %v958 = vpop.f32.mrf.mxu0
  %959 = vmatprep.mubr.bf16.mxu0 %v221
  %960 = vmatmul.mubr.bf16.gmra.mxu0 %v220
  %v961 = vpop.f32.mrf.mxu0
  %v962 = vadd.f32 0.0, %v961
  %v963 = vpop.f32.mrf.mxu0
  %v964 = vpop.f32.mrf.mxu0
  %v965 = vadd.f32 0.0, %v964
  %v966 = vpop.f32.mrf.mxu0
  %967 = vdwg.mxu0
  %v968 = vld [vmem:[%s4] sm:$0xff]
  %v969 = vld [vmem:[%s4 + $0x8] sm:$0xff]
  %v970 = vld [vmem:[%s4 + $0x10] sm:$0xff]
  %v971 = vld [vmem:[%s4 + $0x18] sm:$0xff]
  %v972 = vld [vmem:[%s4 + $0x20] sm:$0xff]
  %v973 = vld [vmem:[%s4 + $0x28] sm:$0xff]
  %v974 = vld [vmem:[%s4 + $0x30] sm:$0xff]
  %v975 = vld [vmem:[%s4 + $0x38] sm:$0xff]
  %v976 = vld [vmem:[%s4 + $0x40] sm:$0xff]
  %v977 = vld [vmem:[%s4 + $0x48] sm:$0xff]
  %v978 = vld [vmem:[%s4 + $0x50] sm:$0xff]
  %v979 = vld [vmem:[%s4 + $0x58] sm:$0xff]
  %v980 = vld [vmem:[%s4 + $0x60] sm:$0xff]
  %v981 = vld [vmem:[%s4 + $0x68] sm:$0xff]
  %v982 = vld [vmem:[%s4 + $0x70] sm:$0xff]
  %v983 = vld [vmem:[%s4 + $0x78] sm:$0xff]
  %v984 = vld [vmem:[%s5] sm:$0x1]
  %v986 = vlaneseq
  %v987 = vshrl.u32 %v986, 7
  %v988 = vsub.s32 0, %v987
  %v989 = vrot.slane %v984, %v988
  %991 = vmatprep.subr.mxu0 0.0
  %992 = vmatpush1.msra.mxu0 %v983
  %993 = vmatprep.subr.mxu0 0.0
  %994 = vmatpush1.msra.mxu0 %v982
  %995 = vmatprep.subr.mxu0 0.0
  %996 = vmatpush1.msra.mxu0 %v981
  %997 = vmatprep.subr.mxu0 0.0
  %998 = vmatpush1.msra.mxu0 %v980
  %999 = vmatprep.subr.mxu0 0.0
  %1000 = vmatpush1.msra.mxu0 %v979
  %1001 = vmatprep.subr.mxu0 0.0
  %1002 = vmatpush1.msra.mxu0 %v978
  %1003 = vmatprep.subr.mxu0 0.0
  %1004 = vmatpush1.msra.mxu0 %v977
  %1005 = vmatprep.subr.mxu0 0.0
  %1006 = vmatpush1.msra.mxu0 %v976
  %1007 = vmatprep.subr.mxu0 0.0
  %1008 = vmatpush1.msra.mxu0 %v975
  %1009 = vmatprep.subr.mxu0 0.0
  %1010 = vmatpush1.msra.mxu0 %v974
  %1011 = vmatprep.subr.mxu0 0.0
  %1012 = vmatpush1.msra.mxu0 %v973
  %1013 = vmatprep.subr.mxu0 0.0
  %1014 = vmatpush1.msra.mxu0 %v972
  %1015 = vmatprep.subr.mxu0 0.0
  %1016 = vmatpush1.msra.mxu0 %v971
  %1017 = vmatprep.subr.mxu0 0.0
  %1018 = vmatpush1.msra.mxu0 %v970
  %1019 = vmatprep.subr.mxu0 0.0
  %1020 = vmatpush1.msra.mxu0 %v969
  %1021 = vmatprep.subr.mxu0 0.0
  %1022 = vmatpush1.msra.mxu0 %v968
  %1023 = vmatprep.subr.mxu0 0.0
  %1024 = vmatpush2.msra.mxu0 0.0
  %1025 = vmatprep.subr.mxu0 0.0
  %1026 = vmatpush2.msra.mxu0 0.0
  %1027 = vmatprep.subr.mxu0 0.0
  %1028 = vmatpush2.msra.mxu0 0.0
  %1029 = vmatprep.subr.mxu0 0.0
  %1030 = vmatpush2.msra.mxu0 0.0
  %1031 = vmatprep.subr.mxu0 0.0
  %1032 = vmatpush2.msra.mxu0 0.0
  %1033 = vmatprep.subr.mxu0 0.0
  %1034 = vmatpush2.msra.mxu0 0.0
  %1035 = vmatprep.subr.mxu0 0.0
  %1036 = vmatpush2.msra.mxu0 0.0
  %1037 = vmatprep.subr.mxu0 0.0
  %1038 = vmatpush2.msra.mxu0 0.0
  %1039 = vmatprep.subr.mxu0 0.0
  %1040 = vmatpush2.msra.mxu0 0.0
  %1041 = vmatprep.subr.mxu0 0.0
  %1042 = vmatpush2.msra.mxu0 0.0
  %1043 = vmatprep.subr.mxu0 0.0
  %1044 = vmatpush2.msra.mxu0 0.0
  %1045 = vmatprep.subr.mxu0 0.0
  %1046 = vmatpush2.msra.mxu0 0.0
  %1047 = vmatprep.subr.mxu0 0.0
  %1048 = vmatpush2.msra.mxu0 0.0
  %1049 = vmatprep.subr.mxu0 0.0
  %1050 = vmatpush2.msra.mxu0 0.0
  %1051 = vmatprep.subr.mxu0 0.0
  %1052 = vmatpush2.msra.mxu0 0.0
  %1053 = vmatprep.subr.mxu0 0.0
  %1054 = vmatpush2.msra.mxu0 0.0
  %1055 = vmatprep.mubr.f32.mxu0 0.0
  %1056 = vmatmul.mubr.f32.gmra.mxu0 %v842
  %v1057 = vpop.f32.mrf.mxu0
  %v1058 = vadd.f32 %v989, %v1057
  %v1059 = vpop.f32.mrf.mxu0
  %1060 = vmatprep.mubr.f32.mxu0 0.0
  %1061 = vmatmul.mubr.f32.gmra.mxu0 %v845
  %v1062 = vpop.f32.mrf.mxu0
  %v1063 = vadd.f32 %v989, %v1062
  %v1064 = vpop.f32.mrf.mxu0
  %1065 = vmatprep.mubr.f32.mxu0 0.0
  %1066 = vmatmul.mubr.f32.gmra.mxu0 %v850
  %v1067 = vpop.f32.mrf.mxu0
  %v1068 = vadd.f32 %v989, %v1067
  %v1069 = vpop.f32.mrf.mxu0
  %1070 = vmatprep.mubr.f32.mxu0 0.0
  %1071 = vmatmul.mubr.f32.gmra.mxu0 %v853
  %v1072 = vpop.f32.mrf.mxu0
  %v1073 = vadd.f32 %v989, %v1072
  %v1074 = vpop.f32.mrf.mxu0
  %1075 = vmatprep.mubr.f32.mxu0 0.0
  %1076 = vmatmul.mubr.f32.gmra.mxu0 %v858
  %v1077 = vpop.f32.mrf.mxu0
  %v1078 = vadd.f32 %v989, %v1077
  %v1079 = vpop.f32.mrf.mxu0
  %1080 = vmatprep.mubr.f32.mxu0 0.0
  %1081 = vmatmul.mubr.f32.gmra.mxu0 %v861
  %v1082 = vpop.f32.mrf.mxu0
  %v1083 = vadd.f32 %v989, %v1082
  %v1084 = vpop.f32.mrf.mxu0
  %1085 = vmatprep.mubr.f32.mxu0 0.0
  %1086 = vmatmul.mubr.f32.gmra.mxu0 %v866
  %v1087 = vpop.f32.mrf.mxu0
  %v1088 = vadd.f32 %v989, %v1087
  %v1089 = vpop.f32.mrf.mxu0
  %1090 = vmatprep.mubr.f32.mxu0 0.0
  %1091 = vmatmul.mubr.f32.gmra.mxu0 %v869
  %v1092 = vpop.f32.mrf.mxu0
  %v1093 = vadd.f32 %v989, %v1092
  %v1094 = vpop.f32.mrf.mxu0
  %1095 = vmatprep.mubr.f32.mxu0 0.0
  %1096 = vmatmul.mubr.f32.gmra.mxu0 %v874
  %v1097 = vpop.f32.mrf.mxu0
  %v1098 = vadd.f32 %v989, %v1097
  %v1099 = vpop.f32.mrf.mxu0
  %1100 = vmatprep.mubr.f32.mxu0 0.0
  %1101 = vmatmul.mubr.f32.gmra.mxu0 %v877
  %v1102 = vpop.f32.mrf.mxu0
  %v1103 = vadd.f32 %v989, %v1102
  %v1104 = vpop.f32.mrf.mxu0
  %1105 = vmatprep.mubr.f32.mxu0 0.0
  %1106 = vmatmul.mubr.f32.gmra.mxu0 %v882
  %v1107 = vpop.f32.mrf.mxu0
  %v1108 = vadd.f32 %v989, %v1107
  %v1109 = vpop.f32.mrf.mxu0
  %1110 = vmatprep.mubr.f32.mxu0 0.0
  %1111 = vmatmul.mubr.f32.gmra.mxu0 %v885
  %v1112 = vpop.f32.mrf.mxu0
  %v1113 = vadd.f32 %v989, %v1112
  %v1114 = vpop.f32.mrf.mxu0
  %1115 = vmatprep.mubr.f32.mxu0 0.0
  %1116 = vmatmul.mubr.f32.gmra.mxu0 %v890
  %v1117 = vpop.f32.mrf.mxu0
  %v1118 = vadd.f32 %v989, %v1117
  %v1119 = vpop.f32.mrf.mxu0
  %1120 = vmatprep.mubr.f32.mxu0 0.0
  %1121 = vmatmul.mubr.f32.gmra.mxu0 %v893
  %v1122 = vpop.f32.mrf.mxu0
  %v1123 = vadd.f32 %v989, %v1122
  %v1124 = vpop.f32.mrf.mxu0
  %1125 = vmatprep.mubr.f32.mxu0 0.0
  %1126 = vmatmul.mubr.f32.gmra.mxu0 %v898
  %v1127 = vpop.f32.mrf.mxu0
  %v1128 = vadd.f32 %v989, %v1127
  %v1129 = vpop.f32.mrf.mxu0
  %1130 = vmatprep.mubr.f32.mxu0 0.0
  %1131 = vmatmul.mubr.f32.gmra.mxu0 %v901
  %v1132 = vpop.f32.mrf.mxu0
  %v1133 = vadd.f32 %v989, %v1132
  %v1134 = vpop.f32.mrf.mxu0
  %1135 = vmatprep.mubr.f32.mxu0 0.0
  %1136 = vmatmul.mubr.f32.gmra.mxu0 %v906
  %v1137 = vpop.f32.mrf.mxu0
  %v1138 = vadd.f32 %v989, %v1137
  %v1139 = vpop.f32.mrf.mxu0
  %1140 = vmatprep.mubr.f32.mxu0 0.0
  %1141 = vmatmul.mubr.f32.gmra.mxu0 %v909
  %v1142 = vpop.f32.mrf.mxu0
  %v1143 = vadd.f32 %v989, %v1142
  %v1144 = vpop.f32.mrf.mxu0
  %1145 = vmatprep.mubr.f32.mxu0 0.0
  %1146 = vmatmul.mubr.f32.gmra.mxu0 %v914
  %v1147 = vpop.f32.mrf.mxu0
  %v1148 = vadd.f32 %v989, %v1147
  %v1149 = vpop.f32.mrf.mxu0
  %1150 = vmatprep.mubr.f32.mxu0 0.0
  %1151 = vmatmul.mubr.f32.gmra.mxu0 %v917
  %v1152 = vpop.f32.mrf.mxu0
  %v1153 = vadd.f32 %v989, %v1152
  %v1154 = vpop.f32.mrf.mxu0
  %1155 = vmatprep.mubr.f32.mxu0 0.0
  %1156 = vmatmul.mubr.f32.gmra.mxu0 %v922
  %v1157 = vpop.f32.mrf.mxu0
  %v1158 = vadd.f32 %v989, %v1157
  %v1159 = vpop.f32.mrf.mxu0
  %1160 = vmatprep.mubr.f32.mxu0 0.0
  %1161 = vmatmul.mubr.f32.gmra.mxu0 %v925
  %v1162 = vpop.f32.mrf.mxu0
  %v1163 = vadd.f32 %v989, %v1162
  %v1164 = vpop.f32.mrf.mxu0
  %1165 = vmatprep.mubr.f32.mxu0 0.0
  %1166 = vmatmul.mubr.f32.gmra.mxu0 %v930
  %v1167 = vpop.f32.mrf.mxu0
  %v1168 = vadd.f32 %v989, %v1167
  %v1169 = vpop.f32.mrf.mxu0
  %1170 = vmatprep.mubr.f32.mxu0 0.0
  %1171 = vmatmul.mubr.f32.gmra.mxu0 %v933
  %v1172 = vpop.f32.mrf.mxu0
  %v1173 = vadd.f32 %v989, %v1172
  %v1174 = vpop.f32.mrf.mxu0
  %1175 = vmatprep.mubr.f32.mxu0 0.0
  %1176 = vmatmul.mubr.f32.gmra.mxu0 %v938
  %v1177 = vpop.f32.mrf.mxu0
  %v1178 = vadd.f32 %v989, %v1177
  %v1179 = vpop.f32.mrf.mxu0
  %1180 = vmatprep.mubr.f32.mxu0 0.0
  %1181 = vmatmul.mubr.f32.gmra.mxu0 %v941
  %v1182 = vpop.f32.mrf.mxu0
  %v1183 = vadd.f32 %v989, %v1182
  %v1184 = vpop.f32.mrf.mxu0
  %1185 = vmatprep.mubr.f32.mxu0 0.0
  %1186 = vmatmul.mubr.f32.gmra.mxu0 %v946
  %v1187 = vpop.f32.mrf.mxu0
  %v1188 = vadd.f32 %v989, %v1187
  %v1189 = vpop.f32.mrf.mxu0
  %1190 = vmatprep.mubr.f32.mxu0 0.0
  %1191 = vmatmul.mubr.f32.gmra.mxu0 %v949
  %v1192 = vpop.f32.mrf.mxu0
  %v1193 = vadd.f32 %v989, %v1192
  %v1194 = vpop.f32.mrf.mxu0
  %1195 = vmatprep.mubr.f32.mxu0 0.0
  %1196 = vmatmul.mubr.f32.gmra.mxu0 %v954
  %v1197 = vpop.f32.mrf.mxu0
  %v1198 = vadd.f32 %v989, %v1197
  %v1199 = vpop.f32.mrf.mxu0
  %1200 = vmatprep.mubr.f32.mxu0 0.0
  %1201 = vmatmul.mubr.f32.gmra.mxu0 %v957
  %v1202 = vpop.f32.mrf.mxu0
  %v1203 = vadd.f32 %v989, %v1202
  %v1204 = vpop.f32.mrf.mxu0
  %1205 = vmatprep.mubr.f32.mxu0 0.0
  %1206 = vmatmul.mubr.f32.gmra.mxu0 %v962
  %v1207 = vpop.f32.mrf.mxu0
  %v1208 = vadd.f32 %v989, %v1207
  %v1209 = vpop.f32.mrf.mxu0
  %1210 = vmatprep.mubr.f32.mxu0 0.0
  %1211 = vmatmul.mubr.f32.gmra.mxu0 %v965
  %v1212 = vpop.f32.mrf.mxu0
  %v1213 = vadd.f32 %v989, %v1212
  %v1214 = vpop.f32.mrf.mxu0
  %1215 = vdwg.mxu0
  %v1216 = vmax.f32 %v1058, 0.0
  %v1217 = vmax.f32 %v1063, 0.0
  %v1218 = vmax.f32 %v1068, 0.0
  %v1219 = vmax.f32 %v1073, 0.0
  %v1220 = vmax.f32 %v1078, 0.0
  %v1221 = vmax.f32 %v1083, 0.0
  %v1222 = vmax.f32 %v1088, 0.0
  %v1223 = vmax.f32 %v1093, 0.0
  %v1224 = vmax.f32 %v1098, 0.0
  %v1225 = vmax.f32 %v1103, 0.0
  %v1226 = vmax.f32 %v1108, 0.0
  %v1227 = vmax.f32 %v1113, 0.0
  %v1228 = vmax.f32 %v1118, 0.0
  %v1229 = vmax.f32 %v1123, 0.0
  %v1230 = vmax.f32 %v1128, 0.0
  %v1231 = vmax.f32 %v1133, 0.0
  %v1232 = vmax.f32 %v1138, 0.0
  %v1233 = vmax.f32 %v1143, 0.0
  %v1234 = vmax.f32 %v1148, 0.0
  %v1235 = vmax.f32 %v1153, 0.0
  %v1236 = vmax.f32 %v1158, 0.0
  %v1237 = vmax.f32 %v1163, 0.0
  %v1238 = vmax.f32 %v1168, 0.0
  %v1239 = vmax.f32 %v1173, 0.0
  %v1240 = vmax.f32 %v1178, 0.0
  %v1241 = vmax.f32 %v1183, 0.0
  %v1242 = vmax.f32 %v1188, 0.0
  %v1243 = vmax.f32 %v1193, 0.0
  %v1244 = vmax.f32 %v1198, 0.0
  %v1245 = vmax.f32 %v1203, 0.0
  %v1246 = vmax.f32 %v1208, 0.0
  %v1247 = vmax.f32 %v1213, 0.0
  %v1248 = vld [vmem:[%s6] sm:$0xff]
  %v1249 = vld [vmem:[%s6 + $0x8] sm:$0xff]
  %v1250 = vld [vmem:[%s6 + $0x10] sm:$0xff]
  %v1251 = vld [vmem:[%s6 + $0x18] sm:$0xff]
  %v1252 = vld [vmem:[%s6 + $0x20] sm:$0xff]
  %v1253 = vld [vmem:[%s6 + $0x28] sm:$0xff]
  %v1254 = vld [vmem:[%s6 + $0x30] sm:$0xff]
  %v1255 = vld [vmem:[%s6 + $0x38] sm:$0xff]
  %v1256 = vld [vmem:[%s6 + $0x40] sm:$0xff]
  %v1257 = vld [vmem:[%s6 + $0x48] sm:$0xff]
  %v1258 = vld [vmem:[%s6 + $0x50] sm:$0xff]
  %v1259 = vld [vmem:[%s6 + $0x58] sm:$0xff]
  %v1260 = vld [vmem:[%s6 + $0x60] sm:$0xff]
  %v1261 = vld [vmem:[%s6 + $0x68] sm:$0xff]
  %v1262 = vld [vmem:[%s6 + $0x70] sm:$0xff]
  %v1263 = vld [vmem:[%s6 + $0x78] sm:$0xff]
  %v1264 = vld [vmem:[%s7] sm:$0x1]
  %v1266 = vlaneseq
  %v1267 = vshrl.u32 %v1266, 7
  %v1268 = vsub.s32 0, %v1267
  %v1269 = vrot.slane %v1264, %v1268
  %1271 = vmatprep.subr.mxu0 0.0
  %1272 = vmatpush1.msra.mxu0 %v1263
  %1273 = vmatprep.subr.mxu0 0.0
  %1274 = vmatpush1.msra.mxu0 %v1262
  %1275 = vmatprep.subr.mxu0 0.0
  %1276 = vmatpush1.msra.mxu0 %v1261
  %1277 = vmatprep.subr.mxu0 0.0
  %1278 = vmatpush1.msra.mxu0 %v1260
  %1279 = vmatprep.subr.mxu0 0.0
  %1280 = vmatpush1.msra.mxu0 %v1259
  %1281 = vmatprep.subr.mxu0 0.0
  %1282 = vmatpush1.msra.mxu0 %v1258
  %1283 = vmatprep.subr.mxu0 0.0
  %1284 = vmatpush1.msra.mxu0 %v1257
  %1285 = vmatprep.subr.mxu0 0.0
  %1286 = vmatpush1.msra.mxu0 %v1256
  %1287 = vmatprep.subr.mxu0 0.0
  %1288 = vmatpush1.msra.mxu0 %v1255
  %1289 = vmatprep.subr.mxu0 0.0
  %1290 = vmatpush1.msra.mxu0 %v1254
  %1291 = vmatprep.subr.mxu0 0.0
  %1292 = vmatpush1.msra.mxu0 %v1253
  %1293 = vmatprep.subr.mxu0 0.0
  %1294 = vmatpush1.msra.mxu0 %v1252
  %1295 = vmatprep.subr.mxu0 0.0
  %1296 = vmatpush1.msra.mxu0 %v1251
  %1297 = vmatprep.subr.mxu0 0.0
  %1298 = vmatpush1.msra.mxu0 %v1250
  %1299 = vmatprep.subr.mxu0 0.0
  %1300 = vmatpush1.msra.mxu0 %v1249
  %1301 = vmatprep.subr.mxu0 0.0
  %1302 = vmatpush1.msra.mxu0 %v1248
  %1303 = vmatprep.subr.mxu0 0.0
  %1304 = vmatpush2.msra.mxu0 0.0
  %1305 = vmatprep.subr.mxu0 0.0
  %1306 = vmatpush2.msra.mxu0 0.0
  %1307 = vmatprep.subr.mxu0 0.0
  %1308 = vmatpush2.msra.mxu0 0.0
  %1309 = vmatprep.subr.mxu0 0.0
  %1310 = vmatpush2.msra.mxu0 0.0
  %1311 = vmatprep.subr.mxu0 0.0
  %1312 = vmatpush2.msra.mxu0 0.0
  %1313 = vmatprep.subr.mxu0 0.0
  %1314 = vmatpush2.msra.mxu0 0.0
  %1315 = vmatprep.subr.mxu0 0.0
  %1316 = vmatpush2.msra.mxu0 0.0
  %1317 = vmatprep.subr.mxu0 0.0
  %1318 = vmatpush2.msra.mxu0 0.0
  %1319 = vmatprep.subr.mxu0 0.0
  %1320 = vmatpush2.msra.mxu0 0.0
  %1321 = vmatprep.subr.mxu0 0.0
  %1322 = vmatpush2.msra.mxu0 0.0
  %1323 = vmatprep.subr.mxu0 0.0
  %1324 = vmatpush2.msra.mxu0 0.0
  %1325 = vmatprep.subr.mxu0 0.0
  %1326 = vmatpush2.msra.mxu0 0.0
  %1327 = vmatprep.subr.mxu0 0.0
  %1328 = vmatpush2.msra.mxu0 0.0
  %1329 = vmatprep.subr.mxu0 0.0
  %1330 = vmatpush2.msra.mxu0 0.0
  %1331 = vmatprep.subr.mxu0 0.0
  %1332 = vmatpush2.msra.mxu0 0.0
  %1333 = vmatprep.subr.mxu0 0.0
  %1334 = vmatpush2.msra.mxu0 0.0
  %1335 = vmatprep.mubr.f32.mxu0 0.0
  %1336 = vmatmul.mubr.f32.gmra.mxu0 %v1216
  %v1337 = vpop.f32.mrf.mxu0
  %v1338 = vadd.f32 %v1269, %v1337
  %v1339 = vpop.f32.mrf.mxu0
  %1340 = vmatprep.mubr.f32.mxu0 0.0
  %1341 = vmatmul.mubr.f32.gmra.mxu0 %v1217
  %v1342 = vpop.f32.mrf.mxu0
  %v1343 = vadd.f32 %v1269, %v1342
  %v1344 = vpop.f32.mrf.mxu0
  %1345 = vmatprep.mubr.f32.mxu0 0.0
  %1346 = vmatmul.mubr.f32.gmra.mxu0 %v1218
  %v1347 = vpop.f32.mrf.mxu0
  %v1348 = vadd.f32 %v1269, %v1347
  %v1349 = vpop.f32.mrf.mxu0
  %1350 = vmatprep.mubr.f32.mxu0 0.0
  %1351 = vmatmul.mubr.f32.gmra.mxu0 %v1219
  %v1352 = vpop.f32.mrf.mxu0
  %v1353 = vadd.f32 %v1269, %v1352
  %v1354 = vpop.f32.mrf.mxu0
  %1355 = vmatprep.mubr.f32.mxu0 0.0
  %1356 = vmatmul.mubr.f32.gmra.mxu0 %v1220
  %v1357 = vpop.f32.mrf.mxu0
  %v1358 = vadd.f32 %v1269, %v1357
  %v1359 = vpop.f32.mrf.mxu0
  %1360 = vmatprep.mubr.f32.mxu0 0.0
  %1361 = vmatmul.mubr.f32.gmra.mxu0 %v1221
  %v1362 = vpop.f32.mrf.mxu0
  %v1363 = vadd.f32 %v1269, %v1362
  %v1364 = vpop.f32.mrf.mxu0
  %1365 = vmatprep.mubr.f32.mxu0 0.0
  %1366 = vmatmul.mubr.f32.gmra.mxu0 %v1222
  %v1367 = vpop.f32.mrf.mxu0
  %v1368 = vadd.f32 %v1269, %v1367
  %v1369 = vpop.f32.mrf.mxu0
  %1370 = vmatprep.mubr.f32.mxu0 0.0
  %1371 = vmatmul.mubr.f32.gmra.mxu0 %v1223
  %v1372 = vpop.f32.mrf.mxu0
  %v1373 = vadd.f32 %v1269, %v1372
  %v1374 = vpop.f32.mrf.mxu0
  %1375 = vmatprep.mubr.f32.mxu0 0.0
  %1376 = vmatmul.mubr.f32.gmra.mxu0 %v1224
  %v1377 = vpop.f32.mrf.mxu0
  %v1378 = vadd.f32 %v1269, %v1377
  %v1379 = vpop.f32.mrf.mxu0
  %1380 = vmatprep.mubr.f32.mxu0 0.0
  %1381 = vmatmul.mubr.f32.gmra.mxu0 %v1225
  %v1382 = vpop.f32.mrf.mxu0
  %v1383 = vadd.f32 %v1269, %v1382
  %v1384 = vpop.f32.mrf.mxu0
  %1385 = vmatprep.mubr.f32.mxu0 0.0
  %1386 = vmatmul.mubr.f32.gmra.mxu0 %v1226
  %v1387 = vpop.f32.mrf.mxu0
  %v1388 = vadd.f32 %v1269, %v1387
  %v1389 = vpop.f32.mrf.mxu0
  %1390 = vmatprep.mubr.f32.mxu0 0.0
  %1391 = vmatmul.mubr.f32.gmra.mxu0 %v1227
  %v1392 = vpop.f32.mrf.mxu0
  %v1393 = vadd.f32 %v1269, %v1392
  %v1394 = vpop.f32.mrf.mxu0
  %1395 = vmatprep.mubr.f32.mxu0 0.0
  %1396 = vmatmul.mubr.f32.gmra.mxu0 %v1228
  %v1397 = vpop.f32.mrf.mxu0
  %v1398 = vadd.f32 %v1269, %v1397
  %v1399 = vpop.f32.mrf.mxu0
  %1400 = vmatprep.mubr.f32.mxu0 0.0
  %1401 = vmatmul.mubr.f32.gmra.mxu0 %v1229
  %v1402 = vpop.f32.mrf.mxu0
  %v1403 = vadd.f32 %v1269, %v1402
  %v1404 = vpop.f32.mrf.mxu0
  %1405 = vmatprep.mubr.f32.mxu0 0.0
  %1406 = vmatmul.mubr.f32.gmra.mxu0 %v1230
  %v1407 = vpop.f32.mrf.mxu0
  %v1408 = vadd.f32 %v1269, %v1407
  %v1409 = vpop.f32.mrf.mxu0
  %1410 = vmatprep.mubr.f32.mxu0 0.0
  %1411 = vmatmul.mubr.f32.gmra.mxu0 %v1231
  %v1412 = vpop.f32.mrf.mxu0
  %v1413 = vadd.f32 %v1269, %v1412
  %v1414 = vpop.f32.mrf.mxu0
  %1415 = vmatprep.mubr.f32.mxu0 0.0
  %1416 = vmatmul.mubr.f32.gmra.mxu0 %v1232
  %v1417 = vpop.f32.mrf.mxu0
  %v1418 = vadd.f32 %v1269, %v1417
  %v1419 = vpop.f32.mrf.mxu0
  %1420 = vmatprep.mubr.f32.mxu0 0.0
  %1421 = vmatmul.mubr.f32.gmra.mxu0 %v1233
  %v1422 = vpop.f32.mrf.mxu0
  %v1423 = vadd.f32 %v1269, %v1422
  %v1424 = vpop.f32.mrf.mxu0
  %1425 = vmatprep.mubr.f32.mxu0 0.0
  %1426 = vmatmul.mubr.f32.gmra.mxu0 %v1234
  %v1427 = vpop.f32.mrf.mxu0
  %v1428 = vadd.f32 %v1269, %v1427
  %v1429 = vpop.f32.mrf.mxu0
  %1430 = vmatprep.mubr.f32.mxu0 0.0
  %1431 = vmatmul.mubr.f32.gmra.mxu0 %v1235
  %v1432 = vpop.f32.mrf.mxu0
  %v1433 = vadd.f32 %v1269, %v1432
  %v1434 = vpop.f32.mrf.mxu0
  %1435 = vmatprep.mubr.f32.mxu0 0.0
  %1436 = vmatmul.mubr.f32.gmra.mxu0 %v1236
  %v1437 = vpop.f32.mrf.mxu0
  %v1438 = vadd.f32 %v1269, %v1437
  %v1439 = vpop.f32.mrf.mxu0
  %1440 = vmatprep.mubr.f32.mxu0 0.0
  %1441 = vmatmul.mubr.f32.gmra.mxu0 %v1237
  %v1442 = vpop.f32.mrf.mxu0
  %v1443 = vadd.f32 %v1269, %v1442
  %v1444 = vpop.f32.mrf.mxu0
  %1445 = vmatprep.mubr.f32.mxu0 0.0
  %1446 = vmatmul.mubr.f32.gmra.mxu0 %v1238
  %v1447 = vpop.f32.mrf.mxu0
  %v1448 = vadd.f32 %v1269, %v1447
  %v1449 = vpop.f32.mrf.mxu0
  %1450 = vmatprep.mubr.f32.mxu0 0.0
  %1451 = vmatmul.mubr.f32.gmra.mxu0 %v1239
  %v1452 = vpop.f32.mrf.mxu0
  %v1453 = vadd.f32 %v1269, %v1452
  %v1454 = vpop.f32.mrf.mxu0
  %1455 = vmatprep.mubr.f32.mxu0 0.0
  %1456 = vmatmul.mubr.f32.gmra.mxu0 %v1240
  %v1457 = vpop.f32.mrf.mxu0
  %v1458 = vadd.f32 %v1269, %v1457
  %v1459 = vpop.f32.mrf.mxu0
  %1460 = vmatprep.mubr.f32.mxu0 0.0
  %1461 = vmatmul.mubr.f32.gmra.mxu0 %v1241
  %v1462 = vpop.f32.mrf.mxu0
  %v1463 = vadd.f32 %v1269, %v1462
  %v1464 = vpop.f32.mrf.mxu0
  %1465 = vmatprep.mubr.f32.mxu0 0.0
  %1466 = vmatmul.mubr.f32.gmra.mxu0 %v1242
  %v1467 = vpop.f32.mrf.mxu0
  %v1468 = vadd.f32 %v1269, %v1467
  %v1469 = vpop.f32.mrf.mxu0
  %1470 = vmatprep.mubr.f32.mxu0 0.0
  %1471 = vmatmul.mubr.f32.gmra.mxu0 %v1243
  %v1472 = vpop.f32.mrf.mxu0
  %v1473 = vadd.f32 %v1269, %v1472
  %v1474 = vpop.f32.mrf.mxu0
  %1475 = vmatprep.mubr.f32.mxu0 0.0
  %1476 = vmatmul.mubr.f32.gmra.mxu0 %v1244
  %v1477 = vpop.f32.mrf.mxu0
  %v1478 = vadd.f32 %v1269, %v1477
  %v1479 = vpop.f32.mrf.mxu0
  %1480 = vmatprep.mubr.f32.mxu0 0.0
  %1481 = vmatmul.mubr.f32.gmra.mxu0 %v1245
  %v1482 = vpop.f32.mrf.mxu0
  %v1483 = vadd.f32 %v1269, %v1482
  %v1484 = vpop.f32.mrf.mxu0
  %1485 = vmatprep.mubr.f32.mxu0 0.0
  %1486 = vmatmul.mubr.f32.gmra.mxu0 %v1246
  %v1487 = vpop.f32.mrf.mxu0
  %v1488 = vadd.f32 %v1269, %v1487
  %v1489 = vpop.f32.mrf.mxu0
  %1490 = vmatprep.mubr.f32.mxu0 0.0
  %1491 = vmatmul.mubr.f32.gmra.mxu0 %v1247
  %v1492 = vpop.f32.mrf.mxu0
  %v1493 = vadd.f32 %v1269, %v1492
  %v1494 = vpop.f32.mrf.mxu0
  %1495 = vdwg.mxu0
  %1496 = vmax.xlane.f32.xlu0 %v1338
  %v1497 = vpop.xlane.xlu0 %1496
  %1498 = vmax.xlane.f32.xlu0 %v1343
  %v1499 = vpop.xlane.xlu0 %1498
  %1500 = vmax.xlane.f32.xlu0 %v1348
  %v1501 = vpop.xlane.xlu0 %1500
  %1502 = vmax.xlane.f32.xlu0 %v1353
  %v1503 = vpop.xlane.xlu0 %1502
  %1504 = vmax.xlane.f32.xlu0 %v1358
  %v1505 = vpop.xlane.xlu0 %1504
  %1506 = vmax.xlane.f32.xlu0 %v1363
  %v1507 = vpop.xlane.xlu0 %1506
  %1508 = vmax.xlane.f32.xlu0 %v1368
  %v1509 = vpop.xlane.xlu0 %1508
  %1510 = vmax.xlane.f32.xlu0 %v1373
  %v1511 = vpop.xlane.xlu0 %1510
  %1512 = vmax.xlane.f32.xlu0 %v1378
  %v1513 = vpop.xlane.xlu0 %1512
  %1514 = vmax.xlane.f32.xlu0 %v1383
  %v1515 = vpop.xlane.xlu0 %1514
  %1516 = vmax.xlane.f32.xlu0 %v1388
  %v1517 = vpop.xlane.xlu0 %1516
  %1518 = vmax.xlane.f32.xlu0 %v1393
  %v1519 = vpop.xlane.xlu0 %1518
  %1520 = vmax.xlane.f32.xlu0 %v1398
  %v1521 = vpop.xlane.xlu0 %1520
  %1522 = vmax.xlane.f32.xlu0 %v1403
  %v1523 = vpop.xlane.xlu0 %1522
  %1524 = vmax.xlane.f32.xlu0 %v1408
  %v1525 = vpop.xlane.xlu0 %1524
  %1526 = vmax.xlane.f32.xlu0 %v1413
  %v1527 = vpop.xlane.xlu0 %1526
  %1528 = vmax.xlane.f32.xlu0 %v1418
  %v1529 = vpop.xlane.xlu0 %1528
  %1530 = vmax.xlane.f32.xlu0 %v1423
  %v1531 = vpop.xlane.xlu0 %1530
  %1532 = vmax.xlane.f32.xlu0 %v1428
  %v1533 = vpop.xlane.xlu0 %1532
  %1534 = vmax.xlane.f32.xlu0 %v1433
  %v1535 = vpop.xlane.xlu0 %1534
  %1536 = vmax.xlane.f32.xlu0 %v1438
  %v1537 = vpop.xlane.xlu0 %1536
  %1538 = vmax.xlane.f32.xlu0 %v1443
  %v1539 = vpop.xlane.xlu0 %1538
  %1540 = vmax.xlane.f32.xlu0 %v1448
  %v1541 = vpop.xlane.xlu0 %1540
  %1542 = vmax.xlane.f32.xlu0 %v1453
  %v1543 = vpop.xlane.xlu0 %1542
  %1544 = vmax.xlane.f32.xlu0 %v1458
  %v1545 = vpop.xlane.xlu0 %1544
  %1546 = vmax.xlane.f32.xlu0 %v1463
  %v1547 = vpop.xlane.xlu0 %1546
  %1548 = vmax.xlane.f32.xlu0 %v1468
  %v1549 = vpop.xlane.xlu0 %1548
  %1550 = vmax.xlane.f32.xlu0 %v1473
  %v1551 = vpop.xlane.xlu0 %1550
  %1552 = vmax.xlane.f32.xlu0 %v1478
  %v1553 = vpop.xlane.xlu0 %1552
  %1554 = vmax.xlane.f32.xlu0 %v1483
  %v1555 = vpop.xlane.xlu0 %1554
  %1556 = vmax.xlane.f32.xlu0 %v1488
  %v1557 = vpop.xlane.xlu0 %1556
  %1558 = vmax.xlane.f32.xlu0 %v1493
  %v1559 = vpop.xlane.xlu0 %1558
  %v1560 = vsub.f32 %v1338, %v1497
  %v1561 = vsub.f32 %v1343, %v1499
  %v1562 = vsub.f32 %v1348, %v1501
  %v1563 = vsub.f32 %v1353, %v1503
  %v1564 = vsub.f32 %v1358, %v1505
  %v1565 = vsub.f32 %v1363, %v1507
  %v1566 = vsub.f32 %v1368, %v1509
  %v1567 = vsub.f32 %v1373, %v1511
  %v1568 = vsub.f32 %v1378, %v1513
  %v1569 = vsub.f32 %v1383, %v1515
  %v1570 = vsub.f32 %v1388, %v1517
  %v1571 = vsub.f32 %v1393, %v1519
  %v1572 = vsub.f32 %v1398, %v1521
  %v1573 = vsub.f32 %v1403, %v1523
  %v1574 = vsub.f32 %v1408, %v1525
  %v1575 = vsub.f32 %v1413, %v1527
  %v1576 = vsub.f32 %v1418, %v1529
  %v1577 = vsub.f32 %v1423, %v1531
  %v1578 = vsub.f32 %v1428, %v1533
  %v1579 = vsub.f32 %v1433, %v1535
  %v1580 = vsub.f32 %v1438, %v1537
  %v1581 = vsub.f32 %v1443, %v1539
  %v1582 = vsub.f32 %v1448, %v1541
  %v1583 = vsub.f32 %v1453, %v1543
  %v1584 = vsub.f32 %v1458, %v1545
  %v1585 = vsub.f32 %v1463, %v1547
  %v1586 = vsub.f32 %v1468, %v1549
  %v1587 = vsub.f32 %v1473, %v1551
  %v1588 = vsub.f32 %v1478, %v1553
  %v1589 = vsub.f32 %v1483, %v1555
  %v1590 = vsub.f32 %v1488, %v1557
  %v1591 = vsub.f32 %v1493, %v1559
  %v1592 = vmul.f32 %v1560, 1.442695
  %v1593 = vpow.pop %v1592
  %v1594 = vmul.f32 %v1561, 1.442695
  %v1595 = vpow.pop %v1594
  %v1596 = vmul.f32 %v1562, 1.442695
  %v1597 = vpow.pop %v1596
  %v1598 = vmul.f32 %v1563, 1.442695
  %v1599 = vpow.pop %v1598
  %v1600 = vmul.f32 %v1564, 1.442695
  %v1601 = vpow.pop %v1600
  %v1602 = vmul.f32 %v1565, 1.442695
  %v1603 = vpow.pop %v1602
  %v1604 = vmul.f32 %v1566, 1.442695
  %v1605 = vpow.pop %v1604
  %v1606 = vmul.f32 %v1567, 1.442695
  %v1607 = vpow.pop %v1606
  %v1608 = vmul.f32 %v1568, 1.442695
  %v1609 = vpow.pop %v1608
  %v1610 = vmul.f32 %v1569, 1.442695
  %v1611 = vpow.pop %v1610
  %v1612 = vmul.f32 %v1570, 1.442695
  %v1613 = vpow.pop %v1612
  %v1614 = vmul.f32 %v1571, 1.442695
  %v1615 = vpow.pop %v1614
  %v1616 = vmul.f32 %v1572, 1.442695
  %v1617 = vpow.pop %v1616
  %v1618 = vmul.f32 %v1573, 1.442695
  %v1619 = vpow.pop %v1618
  %v1620 = vmul.f32 %v1574, 1.442695
  %v1621 = vpow.pop %v1620
  %v1622 = vmul.f32 %v1575, 1.442695
  %v1623 = vpow.pop %v1622
  %v1624 = vmul.f32 %v1576, 1.442695
  %v1625 = vpow.pop %v1624
  %v1626 = vmul.f32 %v1577, 1.442695
  %v1627 = vpow.pop %v1626
  %v1628 = vmul.f32 %v1578, 1.442695
  %v1629 = vpow.pop %v1628
  %v1630 = vmul.f32 %v1579, 1.442695
  %v1631 = vpow.pop %v1630
  %v1632 = vmul.f32 %v1580, 1.442695
  %v1633 = vpow.pop %v1632
  %v1634 = vmul.f32 %v1581, 1.442695
  %v1635 = vpow.pop %v1634
  %v1636 = vmul.f32 %v1582, 1.442695
  %v1637 = vpow.pop %v1636
  %v1638 = vmul.f32 %v1583, 1.442695
  %v1639 = vpow.pop %v1638
  %v1640 = vmul.f32 %v1584, 1.442695
  %v1641 = vpow.pop %v1640
  %v1642 = vmul.f32 %v1585, 1.442695
  %v1643 = vpow.pop %v1642
  %v1644 = vmul.f32 %v1586, 1.442695
  %v1645 = vpow.pop %v1644
  %v1646 = vmul.f32 %v1587, 1.442695
  %v1647 = vpow.pop %v1646
  %v1648 = vmul.f32 %v1588, 1.442695
  %v1649 = vpow.pop %v1648
  %v1650 = vmul.f32 %v1589, 1.442695
  %v1651 = vpow.pop %v1650
  %v1652 = vmul.f32 %v1590, 1.442695
  %v1653 = vpow.pop %v1652
  %v1654 = vmul.f32 %v1591, 1.442695
  %v1655 = vpow.pop %v1654
  %1656 = vadd.xlane.f32.xlu0 %v1593
  %v1657 = vpop.xlane.xlu0 %1656
  %1658 = vadd.xlane.f32.xlu0 %v1595
  %v1659 = vpop.xlane.xlu0 %1658
  %1660 = vadd.xlane.f32.xlu0 %v1597
  %v1661 = vpop.xlane.xlu0 %1660
  %1662 = vadd.xlane.f32.xlu0 %v1599
  %v1663 = vpop.xlane.xlu0 %1662
  %1664 = vadd.xlane.f32.xlu0 %v1601
  %v1665 = vpop.xlane.xlu0 %1664
  %1666 = vadd.xlane.f32.xlu0 %v1603
  %v1667 = vpop.xlane.xlu0 %1666
  %1668 = vadd.xlane.f32.xlu0 %v1605
  %v1669 = vpop.xlane.xlu0 %1668
  %1670 = vadd.xlane.f32.xlu0 %v1607
  %v1671 = vpop.xlane.xlu0 %1670
  %1672 = vadd.xlane.f32.xlu0 %v1609
  %v1673 = vpop.xlane.xlu0 %1672
  %1674 = vadd.xlane.f32.xlu0 %v1611
  %v1675 = vpop.xlane.xlu0 %1674
  %1676 = vadd.xlane.f32.xlu0 %v1613
  %v1677 = vpop.xlane.xlu0 %1676
  %1678 = vadd.xlane.f32.xlu0 %v1615
  %v1679 = vpop.xlane.xlu0 %1678
  %1680 = vadd.xlane.f32.xlu0 %v1617
  %v1681 = vpop.xlane.xlu0 %1680
  %1682 = vadd.xlane.f32.xlu0 %v1619
  %v1683 = vpop.xlane.xlu0 %1682
  %1684 = vadd.xlane.f32.xlu0 %v1621
  %v1685 = vpop.xlane.xlu0 %1684
  %1686 = vadd.xlane.f32.xlu0 %v1623
  %v1687 = vpop.xlane.xlu0 %1686
  %1688 = vadd.xlane.f32.xlu0 %v1625
  %v1689 = vpop.xlane.xlu0 %1688
  %1690 = vadd.xlane.f32.xlu0 %v1627
  %v1691 = vpop.xlane.xlu0 %1690
  %1692 = vadd.xlane.f32.xlu0 %v1629
  %v1693 = vpop.xlane.xlu0 %1692
  %1694 = vadd.xlane.f32.xlu0 %v1631
  %v1695 = vpop.xlane.xlu0 %1694
  %1696 = vadd.xlane.f32.xlu0 %v1633
  %v1697 = vpop.xlane.xlu0 %1696
  %1698 = vadd.xlane.f32.xlu0 %v1635
  %v1699 = vpop.xlane.xlu0 %1698
  %1700 = vadd.xlane.f32.xlu0 %v1637
  %v1701 = vpop.xlane.xlu0 %1700
  %1702 = vadd.xlane.f32.xlu0 %v1639
  %v1703 = vpop.xlane.xlu0 %1702
  %1704 = vadd.xlane.f32.xlu0 %v1641
  %v1705 = vpop.xlane.xlu0 %1704
  %1706 = vadd.xlane.f32.xlu0 %v1643
  %v1707 = vpop.xlane.xlu0 %1706
  %1708 = vadd.xlane.f32.xlu0 %v1645
  %v1709 = vpop.xlane.xlu0 %1708
  %1710 = vadd.xlane.f32.xlu0 %v1647
  %v1711 = vpop.xlane.xlu0 %1710
  %1712 = vadd.xlane.f32.xlu0 %v1649
  %v1713 = vpop.xlane.xlu0 %1712
  %1714 = vadd.xlane.f32.xlu0 %v1651
  %v1715 = vpop.xlane.xlu0 %1714
  %1716 = vadd.xlane.f32.xlu0 %v1653
  %v1717 = vpop.xlane.xlu0 %1716
  %1718 = vadd.xlane.f32.xlu0 %v1655
  %v1719 = vpop.xlane.xlu0 %1718
  %v1720 = vlog2.pop %v1657
  %v1721 = vmul.f32 %v1720, 0.6931472
  %v1722 = vlog2.pop %v1659
  %v1723 = vmul.f32 %v1722, 0.6931472
  %v1724 = vlog2.pop %v1661
  %v1725 = vmul.f32 %v1724, 0.6931472
  %v1726 = vlog2.pop %v1663
  %v1727 = vmul.f32 %v1726, 0.6931472
  %v1728 = vlog2.pop %v1665
  %v1729 = vmul.f32 %v1728, 0.6931472
  %v1730 = vlog2.pop %v1667
  %v1731 = vmul.f32 %v1730, 0.6931472
  %v1732 = vlog2.pop %v1669
  %v1733 = vmul.f32 %v1732, 0.6931472
  %v1734 = vlog2.pop %v1671
  %v1735 = vmul.f32 %v1734, 0.6931472
  %v1736 = vlog2.pop %v1673
  %v1737 = vmul.f32 %v1736, 0.6931472
  %v1738 = vlog2.pop %v1675
  %v1739 = vmul.f32 %v1738, 0.6931472
  %v1740 = vlog2.pop %v1677
  %v1741 = vmul.f32 %v1740, 0.6931472
  %v1742 = vlog2.pop %v1679
  %v1743 = vmul.f32 %v1742, 0.6931472
  %v1744 = vlog2.pop %v1681
  %v1745 = vmul.f32 %v1744, 0.6931472
  %v1746 = vlog2.pop %v1683
  %v1747 = vmul.f32 %v1746, 0.6931472
  %v1748 = vlog2.pop %v1685
  %v1749 = vmul.f32 %v1748, 0.6931472
  %v1750 = vlog2.pop %v1687
  %v1751 = vmul.f32 %v1750, 0.6931472
  %v1752 = vlog2.pop %v1689
  %v1753 = vmul.f32 %v1752, 0.6931472
  %v1754 = vlog2.pop %v1691
  %v1755 = vmul.f32 %v1754, 0.6931472
  %v1756 = vlog2.pop %v1693
  %v1757 = vmul.f32 %v1756, 0.6931472
  %v1758 = vlog2.pop %v1695
  %v1759 = vmul.f32 %v1758, 0.6931472
  %v1760 = vlog2.pop %v1697
  %v1761 = vmul.f32 %v1760, 0.6931472
  %v1762 = vlog2.pop %v1699
  %v1763 = vmul.f32 %v1762, 0.6931472
  %v1764 = vlog2.pop %v1701
  %v1765 = vmul.f32 %v1764, 0.6931472
  %v1766 = vlog2.pop %v1703
  %v1767 = vmul.f32 %v1766, 0.6931472
  %v1768 = vlog2.pop %v1705
  %v1769 = vmul.f32 %v1768, 0.6931472
  %v1770 = vlog2.pop %v1707
  %v1771 = vmul.f32 %v1770, 0.6931472
  %v1772 = vlog2.pop %v1709
  %v1773 = vmul.f32 %v1772, 0.6931472
  %v1774 = vlog2.pop %v1711
  %v1775 = vmul.f32 %v1774, 0.6931472
  %v1776 = vlog2.pop %v1713
  %v1777 = vmul.f32 %v1776, 0.6931472
  %v1778 = vlog2.pop %v1715
  %v1779 = vmul.f32 %v1778, 0.6931472
  %v1780 = vlog2.pop %v1717
  %v1781 = vmul.f32 %v1780, 0.6931472
  %v1782 = vlog2.pop %v1719
  %v1783 = vmul.f32 %v1782, 0.6931472
  %v1784 = vadd.f32 %v1497, %v1721
  %v1785 = vadd.f32 %v1499, %v1723
  %v1786 = vadd.f32 %v1501, %v1725
  %v1787 = vadd.f32 %v1503, %v1727
  %v1788 = vadd.f32 %v1505, %v1729
  %v1789 = vadd.f32 %v1507, %v1731
  %v1790 = vadd.f32 %v1509, %v1733
  %v1791 = vadd.f32 %v1511, %v1735
  %v1792 = vadd.f32 %v1513, %v1737
  %v1793 = vadd.f32 %v1515, %v1739
  %v1794 = vadd.f32 %v1517, %v1741
  %v1795 = vadd.f32 %v1519, %v1743
  %v1796 = vadd.f32 %v1521, %v1745
  %v1797 = vadd.f32 %v1523, %v1747
  %v1798 = vadd.f32 %v1525, %v1749
  %v1799 = vadd.f32 %v1527, %v1751
  %v1800 = vadd.f32 %v1529, %v1753
  %v1801 = vadd.f32 %v1531, %v1755
  %v1802 = vadd.f32 %v1533, %v1757
  %v1803 = vadd.f32 %v1535, %v1759
  %v1804 = vadd.f32 %v1537, %v1761
  %v1805 = vadd.f32 %v1539, %v1763
  %v1806 = vadd.f32 %v1541, %v1765
  %v1807 = vadd.f32 %v1543, %v1767
  %v1808 = vadd.f32 %v1545, %v1769
  %v1809 = vadd.f32 %v1547, %v1771
  %v1810 = vadd.f32 %v1549, %v1773
  %v1811 = vadd.f32 %v1551, %v1775
  %v1812 = vadd.f32 %v1553, %v1777
  %v1813 = vadd.f32 %v1555, %v1779
  %v1814 = vadd.f32 %v1557, %v1781
  %v1815 = vadd.f32 %v1559, %v1783
  %v1816 = vsub.f32 %v1338, %v1784
  %v1817 = vsub.f32 %v1343, %v1785
  %v1818 = vsub.f32 %v1348, %v1786
  %v1819 = vsub.f32 %v1353, %v1787
  %v1820 = vsub.f32 %v1358, %v1788
  %v1821 = vsub.f32 %v1363, %v1789
  %v1822 = vsub.f32 %v1368, %v1790
  %v1823 = vsub.f32 %v1373, %v1791
  %v1824 = vsub.f32 %v1378, %v1792
  %v1825 = vsub.f32 %v1383, %v1793
  %v1826 = vsub.f32 %v1388, %v1794
  %v1827 = vsub.f32 %v1393, %v1795
  %v1828 = vsub.f32 %v1398, %v1796
  %v1829 = vsub.f32 %v1403, %v1797
  %v1830 = vsub.f32 %v1408, %v1798
  %v1831 = vsub.f32 %v1413, %v1799
  %v1832 = vsub.f32 %v1418, %v1800
  %v1833 = vsub.f32 %v1423, %v1801
  %v1834 = vsub.f32 %v1428, %v1802
  %v1835 = vsub.f32 %v1433, %v1803
  %v1836 = vsub.f32 %v1438, %v1804
  %v1837 = vsub.f32 %v1443, %v1805
  %v1838 = vsub.f32 %v1448, %v1806
  %v1839 = vsub.f32 %v1453, %v1807
  %v1840 = vsub.f32 %v1458, %v1808
  %v1841 = vsub.f32 %v1463, %v1809
  %v1842 = vsub.f32 %v1468, %v1810
  %v1843 = vsub.f32 %v1473, %v1811
  %v1844 = vsub.f32 %v1478, %v1812
  %v1845 = vsub.f32 %v1483, %v1813
  %v1846 = vsub.f32 %v1488, %v1814
  %v1847 = vsub.f32 %v1493, %v1815
  %1848 = vst [vmem:[%s8] sm:$0xff] %v1816
  %1849 = vst [vmem:[%s8 + $0x8] sm:$0xff] %v1817
  %1850 = vst [vmem:[%s8 + $0x10] sm:$0xff] %v1818
  %1851 = vst [vmem:[%s8 + $0x18] sm:$0xff] %v1819
  %1852 = vst [vmem:[%s8 + $0x20] sm:$0xff] %v1820
  %1853 = vst [vmem:[%s8 + $0x28] sm:$0xff] %v1821
  %1854 = vst [vmem:[%s8 + $0x30] sm:$0xff] %v1822
  %1855 = vst [vmem:[%s8 + $0x38] sm:$0xff] %v1823
  %1856 = vst [vmem:[%s8 + $0x40] sm:$0xff] %v1824
  %1857 = vst [vmem:[%s8 + $0x48] sm:$0xff] %v1825
  %1858 = vst [vmem:[%s8 + $0x50] sm:$0xff] %v1826
  %1859 = vst [vmem:[%s8 + $0x58] sm:$0xff] %v1827
  %1860 = vst [vmem:[%s8 + $0x60] sm:$0xff] %v1828
  %1861 = vst [vmem:[%s8 + $0x68] sm:$0xff] %v1829
  %1862 = vst [vmem:[%s8 + $0x70] sm:$0xff] %v1830
  %1863 = vst [vmem:[%s8 + $0x78] sm:$0xff] %v1831
  %1864 = vst [vmem:[%s8 + $0x80] sm:$0xff] %v1832
  %1865 = vst [vmem:[%s8 + $0x88] sm:$0xff] %v1833
  %1866 = vst [vmem:[%s8 + $0x90] sm:$0xff] %v1834
  %1867 = vst [vmem:[%s8 + $0x98] sm:$0xff] %v1835
  %1868 = vst [vmem:[%s8 + $0xa0] sm:$0xff] %v1836
  %1869 = vst [vmem:[%s8 + $0xa8] sm:$0xff] %v1837
  %1870 = vst [vmem:[%s8 + $0xb0] sm:$0xff] %v1838
  %1871 = vst [vmem:[%s8 + $0xb8] sm:$0xff] %v1839
  %1872 = vst [vmem:[%s8 + $0xc0] sm:$0xff] %v1840
  %1873 = vst [vmem:[%s8 + $0xc8] sm:$0xff] %v1841
  %1874 = vst [vmem:[%s8 + $0xd0] sm:$0xff] %v1842
  %1875 = vst [vmem:[%s8 + $0xd8] sm:$0xff] %v1843
  %1876 = vst [vmem:[%s8 + $0xe0] sm:$0xff] %v1844
  %1877 = vst [vmem:[%s8 + $0xe8] sm:$0xff] %v1845
  %1878 = vst [vmem:[%s8 + $0xf0] sm:$0xff] %v1846
  %1879 = vst [vmem:[%s8 + $0xf8] sm:$0xff] %v1847
  // Predicated region
  $region34: #{gcn_encoder_forward.1} parent=0 // pred_check
    _
  $region35: #{gcn_encoder_forward.1} parent=0 // pred_check_branch
    %1881 = sbr.rel (0) target = $region37
  $region36: #{gcn_encoder_forward.1} parent=0 // pred_region
    _
  $region37: #{gcn_encoder_forward.1} parent=0 // pred_fallthru
    _
  // Predicated region
  $region38: #{gcn_encoder_forward.1} parent=0 // pred_check
    _
  $region39: #{gcn_encoder_forward.1} parent=0 // pred_check_branch
    %1883 = sbr.rel (0) target = $region41
  $region40: #{gcn_encoder_forward.1} parent=0 // pred_region
    _
  $region41: #{gcn_encoder_forward.1} parent=0 // pred_fallthru
    _

</llo_original>
